<compile_context>
chip_gen: v6e
topology: v6e:2x2x1
jax: 0.10.0
libtpu: 0.0.40
codegen_flags: <defaults>
</compile_context>

<pallas_src>
import jax
import jax.numpy as jnp
from jax import lax
from jax.experimental import pallas as pl
from jax.experimental.pallas import tpu as pltpu


def lstm2_kernel(g0_ref, whh0_ref, w1_ref, b1_ref, out_ref,
                 h0_ref, c0_ref, h1_ref, c1_ref):
    # g0_ref : (Ts, Bb, 4H) f32   pre-projected layer-0 inputs (bias folded), time-major
    # whh0   : (H, 4H)      bf16  layer-0 recurrent weights
    # w1     : (2H, 4H)     bf16  layer-1 fused [Wih1; Whh1]
    # b1     : (1, 4H)      f32   layer-1 folded bias
    # out    : (Bb, H)      f32   final hidden state of layer 1
    Ts, Bb, G = g0_ref.shape
    H = out_ref.shape[-1]
    s = pl.program_id(1)                       # sequence-chunk index ("arbitrary")

    @pl.when(s == 0)
    def _init():
        z = jnp.zeros((Bb, H), jnp.float32)
        h0_ref[...] = z
        c0_ref[...] = z
        h1_ref[...] = z
        c1_ref[...] = z

    whh0 = whh0_ref[...]                                   # resident, bf16
    w1 = w1_ref[...]                                       # resident, bf16
    bias1 = jnp.broadcast_to(b1_ref[...], (Bb, G))         # broadcast hoisted out of loop

    def gates(g):
        # Full-width (lane-dense) transcendental passes, then cheap slices.
        sg = jax.nn.sigmoid(g)
        th = jnp.tanh(g)
        return sg[:, 0:H], sg[:, H:2 * H], th[:, 2 * H:3 * H], sg[:, 3 * H:4 * H]

    def step(t, carry):
        h0, c0, h1, c1 = carry
        # Layer 0: input projection already hoisted; only the recurrent matmul remains.
        g0 = g0_ref[t] + jnp.dot(h0.astype(jnp.bfloat16), whh0,
                                 preferred_element_type=jnp.float32)
        i0, f0, gg0, o0 = gates(g0)
        c0 = f0 * c0 + i0 * gg0
        h0 = o0 * jnp.tanh(c0)

        # Layer 1: single fused [h0; h1] @ [Wih1; Whh1] MXU matmul.
        xh = jnp.concatenate([h0, h1], axis=-1).astype(jnp.bfloat16)
        g1 = jnp.dot(xh, w1, preferred_element_type=jnp.float32) + bias1
        i1, f1, gg1, o1 = gates(g1)
        c1 = f1 * c1 + i1 * gg1
        h1 = o1 * jnp.tanh(c1)
        return h0, c0, h1, c1

    carry0 = (h0_ref[...], c0_ref[...], h1_ref[...], c1_ref[...])
    unroll = Ts if Ts <= 16 else 8             # bounded unroll, not full-S unroll
    h0, c0, h1, c1 = lax.fori_loop(0, Ts, step, carry0, unroll=unroll)

    h0_ref[...] = h0
    c0_ref[...] = c0
    h1_ref[...] = h1
    c1_ref[...] = c1

    @pl.when(s == pl.num_programs(1) - 1)
    def _finalize():
        out_ref[...] = h1


def _pick_seq_chunk(S, Bb, G, max_chunk=256, budget_bytes=8 << 20):
    """Largest divisor of S that keeps one (Ts, Bb, 4H) f32 block within budget."""
    cap = max(1, min(max_chunk, budget_bytes // max(1, Bb * G * 4)))
    ts = 1
    for d in range(1, min(S, cap) + 1):
        if S % d == 0:
            ts = d
    return ts


def temporal_encoder_forward(x, params):
    """x: (B, S, D) batch-first, like the PyTorch module. Returns (B, H)."""
    B, S, D = x.shape
    H = params["whh0"].shape[1]
    G = 4 * H
    f32, bf16 = jnp.float32, jnp.bfloat16

    # ---- glue (plain JAX) -------------------------------------------------
    # Hoisted layer-0 input projection: one big bf16 MXU matmul over all timesteps,
    # bias folded, emitted directly in time-major (S, B, 4H) order.
    b0 = (params["bih0"] + params["bhh0"]).astype(f32)
    g0 = jnp.einsum("bsd,gd->sbg", x.astype(bf16), params["wih0"].astype(bf16),
                    preferred_element_type=f32) + b0                  # (S, B, 4H) f32

    whh0_bf = params["whh0"].T.astype(bf16)                           # (H, 4H)
    w1_bf = jnp.concatenate([params["wih1"].T, params["whh1"].T],
                            axis=0).astype(bf16)                      # (2H, 4H)
    b1 = (params["bih1"] + params["bhh1"]).reshape(1, G).astype(f32)  # (1, 4H)

    # ---- tiling / VMEM budget ---------------------------------------------
    # Batch blocks: shard across TensorCores (v7x) when B is large; else one block.
    if B >= 16 and B % 16 == 0:
        Tb = B // 2
    else:
        Tb = B
    Ts = _pick_seq_chunk(S, Tb, G)

    g0_blk_bytes = Ts * Tb * G * 4
    weight_bytes = (H * G + 2 * H * G) * 2 + G * 4
    carry_bytes = 5 * Tb * H * 4
    vmem_limit = int(2 * g0_blk_bytes + 2 * weight_bytes + carry_bytes + (4 << 20))
    vmem_limit = min(max(vmem_limit, 16 << 20), 48 << 20)

    grid = (B // Tb, S // Ts)   # (batch blocks: parallel, seq chunks: arbitrary)

    return pl.pallas_call(
        lstm2_kernel,
        out_shape=jax.ShapeDtypeStruct((B, H), f32),
        grid_spec=pltpu.PrefetchScalarGridSpec(
            num_scalar_prefetch=0,
            grid=grid,
            in_specs=[
                pl.BlockSpec((Ts, Tb, G), lambda b, s: (s, b, 0)),   # streamed G0 chunks
                pl.BlockSpec((H, G), lambda b, s: (0, 0)),           # resident weights
                pl.BlockSpec((2 * H, G), lambda b, s: (0, 0)),
                pl.BlockSpec((1, G), lambda b, s: (0, 0)),
            ],
            out_specs=pl.BlockSpec((Tb, H), lambda b, s: (b, 0)),
            scratch_shapes=[pltpu.VMEM((Tb, H), f32)] * 4,           # h0, c0, h1, c1 carry
        ),
        compiler_params=pltpu.CompilerParams(
            dimension_semantics=("parallel", "arbitrary"),
            vmem_limit_bytes=vmem_limit,
        ),
    )(g0, whh0_bf, w1_bf, b1)


def init_params(key, input_dim, hidden_dim):
    """Deterministic init matching PyTorch nn.LSTM shapes (uniform +-1/sqrt(H))."""
    H = hidden_dim
    k = 1.0 / jnp.sqrt(jnp.float32(H))
    keys = jax.random.split(key, 8)
    u = lambda kk, shape: jax.random.uniform(kk, shape, jnp.float32, -k, k)
    return {
        "wih0": u(keys[0], (4 * H, input_dim)),
        "whh0": u(keys[1], (4 * H, H)),
        "bih0": u(keys[2], (4 * H,)),
        "bhh0": u(keys[3], (4 * H,)),
        "wih1": u(keys[4], (4 * H, H)),
        "whh1": u(keys[5], (4 * H, H)),
        "bih1": u(keys[6], (4 * H,)),
        "bhh1": u(keys[7], (4 * H,)),
    }


def reference_forward(x, params, matmul_dtype=jnp.float32):
    """Pure-JAX reference (lax.scan) reproducing PyTorch nn.LSTM semantics.
    matmul_dtype=bf16 reproduces the kernel's mixed-precision matmul path."""
    B, S, D = x.shape
    H = params["whh0"].shape[1]
    md = matmul_dtype

    def mm(a, w):
        return jnp.dot(a.astype(md), w.T.astype(md),
                       preferred_element_type=jnp.float32)

    def cell(x_t, h, c, wih, whh, b):
        g = mm(x_t, wih) + mm(h, whh) + b
        i, f, gg, o = jnp.split(g, 4, axis=-1)
        c_new = jax.nn.sigmoid(f) * c + jax.nn.sigmoid(i) * jnp.tanh(gg)
        h_new = jax.nn.sigmoid(o) * jnp.tanh(c_new)
        return h_new, c_new

    def step(carry, x_t):
        h0, c0, h1, c1 = carry
        h0, c0 = cell(x_t, h0, c0, params["wih0"], params["whh0"],
                      params["bih0"] + params["bhh0"])
        h1, c1 = cell(h0, h1, c1, params["wih1"], params["whh1"],
                      params["bih1"] + params["bhh1"])
        return (h0, c0, h1, c1), None

    z = jnp.zeros((B, H), jnp.float32)
    (h0, c0, h1, c1), _ = lax.scan(step, (z, z, z, z),
                                   jnp.transpose(x, (1, 0, 2)).astype(jnp.float32))
    return h1


if __name__ == "__main__":
    B, S, D, H = 2, 8, 4, 32  # batch, seq, input_dim, hidden_dim

    key = jax.random.PRNGKey(0)
    kx, kp = jax.random.split(key)
    x = jax.random.normal(kx, (B, S, D), jnp.float32)
    params = init_params(kp, D, H)

    out = temporal_encoder_forward(x, params)
    out = jax.block_until_ready(out)
    assert out.shape == (B, H)

    # Tight check against a reference that mirrors the kernel's bf16 matmul inputs,
    # loose check against the full-f32 PyTorch-equivalent reference.
    ref_matched = reference_forward(x, params, matmul_dtype=jnp.bfloat16)
    ref_f32 = reference_forward(x, params, matmul_dtype=jnp.float32)
    assert jnp.allclose(out, ref_matched, atol=5e-3, rtol=5e-3), \
        "mismatch vs bf16-matched reference"
    assert jnp.allclose(out, ref_f32, atol=5e-2, rtol=5e-2), \
        "mismatch vs f32 reference"

    print("KERNEL_OK")
</pallas_src>

<mosaic_0001>
module attributes {stable_mosaic.version = 11 : i64} {
  func.func @lstm2_kernel(%arg0: i32, %arg1: i32, %arg2: memref<8x2x128xf32, #tpu.memory_space<vmem>>, %arg3: memref<32x128xbf16, #tpu.memory_space<vmem>>, %arg4: memref<64x128xbf16, #tpu.memory_space<vmem>>, %arg5: memref<1x128xf32, #tpu.memory_space<vmem>>, %arg6: memref<2x32xf32, #tpu.memory_space<vmem>>, %arg7: memref<2x32xf32, #tpu.memory_space<vmem>>, %arg8: memref<2x32xf32, #tpu.memory_space<vmem>>, %arg9: memref<2x32xf32, #tpu.memory_space<vmem>>, %arg10: memref<2x32xf32, #tpu.memory_space<vmem>>) attributes {dimension_semantics = [#tpu.dimension_semantics<parallel>, #tpu.dimension_semantics<arbitrary>], iteration_bounds = array<i64: 1, 1>, scalar_prefetch = 0 : i64, scratch_operands = 4 : i64, tpu.core_type = #tpu.core_type<tc>, window_params = [{transform_indices = @transform_0, window_bounds = array<i64: 8, 2, 128>}, {pipeline_mode = #tpu.pipeline_mode<synchronous>, transform_indices = @transform_1, window_bounds = array<i64: 32, 128>}, {pipeline_mode = #tpu.pipeline_mode<synchronous>, transform_indices = @transform_2, window_bounds = array<i64: 64, 128>}, {pipeline_mode = #tpu.pipeline_mode<synchronous>, transform_indices = @transform_3, window_bounds = array<i64: 1, 128>}, {transform_indices = @transform_4, window_bounds = array<i64: 2, 32>}]} {
    %c0_i32 = arith.constant 0 : i32
    %0 = arith.cmpi eq, %arg1, %c0_i32 : i32
    %1 = arith.extui %0 : i1 to i32
    %c0_i32_0 = arith.constant 0 : i32
    %2 = arith.cmpi ne, %1, %c0_i32_0 : i32
    scf.if %2 {
      %cst_72 = arith.constant 0.000000e+00 : f32
      %339 = vector.broadcast %cst_72 : f32 to vector<2x32xf32>
      %c0_73 = arith.constant 0 : index
      %c0_74 = arith.constant 0 : index
      %340 = vector.load %arg7[%c0_73, %c0_74] : memref<2x32xf32, #tpu.memory_space<vmem>>, vector<2x32xf32>
      tpu.vector_store %arg7[%c0_73, %c0_74], %339 {strides = array<i32>} : memref<2x32xf32, #tpu.memory_space<vmem>>, vector<2x32xf32>,
      %c0_75 = arith.constant 0 : index
      %c0_76 = arith.constant 0 : index
      %341 = vector.load %arg8[%c0_75, %c0_76] : memref<2x32xf32, #tpu.memory_space<vmem>>, vector<2x32xf32>
      tpu.vector_store %arg8[%c0_75, %c0_76], %339 {strides = array<i32>} : memref<2x32xf32, #tpu.memory_space<vmem>>, vector<2x32xf32>,
      %c0_77 = arith.constant 0 : index
      %c0_78 = arith.constant 0 : index
      %342 = vector.load %arg9[%c0_77, %c0_78] : memref<2x32xf32, #tpu.memory_space<vmem>>, vector<2x32xf32>
      tpu.vector_store %arg9[%c0_77, %c0_78], %339 {strides = array<i32>} : memref<2x32xf32, #tpu.memory_space<vmem>>, vector<2x32xf32>,
      %c0_79 = arith.constant 0 : index
      %c0_80 = arith.constant 0 : index
      %343 = vector.load %arg10[%c0_79, %c0_80] : memref<2x32xf32, #tpu.memory_space<vmem>>, vector<2x32xf32>
      tpu.vector_store %arg10[%c0_79, %c0_80], %339 {strides = array<i32>} : memref<2x32xf32, #tpu.memory_space<vmem>>, vector<2x32xf32>,
    } else {
    }
    %c0 = arith.constant 0 : index
    %c0_1 = arith.constant 0 : index
    %3 = vector.load %arg3[%c0, %c0_1] : memref<32x128xbf16, #tpu.memory_space<vmem>>, vector<32x128xbf16>
    %c0_2 = arith.constant 0 : index
    %c0_3 = arith.constant 0 : index
    %4 = vector.load %arg4[%c0_2, %c0_3] : memref<64x128xbf16, #tpu.memory_space<vmem>>, vector<64x128xbf16>
    %c0_4 = arith.constant 0 : index
    %c0_5 = arith.constant 0 : index
    %5 = vector.load %arg5[%c0_4, %c0_5] : memref<1x128xf32, #tpu.memory_space<vmem>>, vector<1x128xf32>
    %6 = vector.shape_cast %5 : vector<1x128xf32> to vector<1x128xf32>
    %7 = vector.broadcast %6 : vector<1x128xf32> to vector<2x128xf32>
    %c0_6 = arith.constant 0 : index
    %c0_7 = arith.constant 0 : index
    %8 = vector.load %arg7[%c0_6, %c0_7] : memref<2x32xf32, #tpu.memory_space<vmem>>, vector<2x32xf32>
    %c0_8 = arith.constant 0 : index
    %c0_9 = arith.constant 0 : index
    %9 = vector.load %arg8[%c0_8, %c0_9] : memref<2x32xf32, #tpu.memory_space<vmem>>, vector<2x32xf32>
    %c0_10 = arith.constant 0 : index
    %c0_11 = arith.constant 0 : index
    %10 = vector.load %arg9[%c0_10, %c0_11] : memref<2x32xf32, #tpu.memory_space<vmem>>, vector<2x32xf32>
    %c0_12 = arith.constant 0 : index
    %c0_13 = arith.constant 0 : index
    %11 = vector.load %arg10[%c0_12, %c0_13] : memref<2x32xf32, #tpu.memory_space<vmem>>, vector<2x32xf32>
    %c0_i32_14 = arith.constant 0 : i32
    %12 = arith.index_cast %c0_i32_14 : i32 to index
    %c0_15 = arith.constant 0 : index
    %c0_16 = arith.constant 0 : index
    %13 = vector.load %arg2[%12, %c0_15, %c0_16] : memref<8x2x128xf32, #tpu.memory_space<vmem>>, vector<1x2x128xf32>
    %14 = vector.shape_cast %13 : vector<1x2x128xf32> to vector<2x128xf32>
    %15 = arith.truncf %8 : vector<2x32xf32> to vector<2x32xbf16>
    %cst = arith.constant dense<0.000000e+00> : vector<2x128xf32>
    %16 = tpu.matmul %15, %3, %cst {dimension_numbers = #tpu.dot_dimension_numbers<[1], [0], [0], [1], [0, 0, 1, 1], [], []>} : vector<2x32xbf16>, vector<32x128xbf16>, vector<2x128xf32> -> vector<2x128xf32>
    %17 = arith.addf %14, %16 : vector<2x128xf32>
    %18 = arith.negf %17 : vector<2x128xf32>
    %19 = math.exp %18 : vector<2x128xf32>
    %cst_17 = arith.constant 1.000000e+00 : f32
    %20 = vector.broadcast %cst_17 : f32 to vector<2x128xf32>
    %21 = arith.addf %20, %19 : vector<2x128xf32>
    %22 = arith.divf %20, %21 : vector<2x128xf32>
    %23 = math.tanh %17 : vector<2x128xf32>
    %24 = vector.extract_strided_slice %22 {offsets = [0, 0], sizes = [2, 32], strides = [1, 1]} : vector<2x128xf32> to vector<2x32xf32>
    %25 = vector.extract_strided_slice %22 {offsets = [0, 32], sizes = [2, 32], strides = [1, 1]} : vector<2x128xf32> to vector<2x32xf32>
    %26 = vector.extract_strided_slice %23 {offsets = [0, 64], sizes = [2, 32], strides = [1, 1]} : vector<2x128xf32> to vector<2x32xf32>
    %27 = vector.extract_strided_slice %22 {offsets = [0, 96], sizes = [2, 32], strides = [1, 1]} : vector<2x128xf32> to vector<2x32xf32>
    %28 = arith.mulf %25, %9 : vector<2x32xf32>
    %29 = arith.mulf %24, %26 : vector<2x32xf32>
    %30 = arith.addf %28, %29 : vector<2x32xf32>
    %31 = math.tanh %30 : vector<2x32xf32>
    %32 = arith.mulf %27, %31 : vector<2x32xf32>
    %33 = tpu.concatenate %32, %10 in 1 : vector<2x32xf32>, vector<2x32xf32> -> vector<2x64xf32>
    %34 = arith.truncf %33 : vector<2x64xf32> to vector<2x64xbf16>
    %cst_18 = arith.constant dense<0.000000e+00> : vector<2x128xf32>
    %35 = tpu.matmul %34, %4, %cst_18 {dimension_numbers = #tpu.dot_dimension_numbers<[1], [0], [0], [1], [0, 0, 1, 1], [], []>} : vector<2x64xbf16>, vector<64x128xbf16>, vector<2x128xf32> -> vector<2x128xf32>
    %36 = arith.addf %35, %7 : vector<2x128xf32>
    %37 = arith.negf %36 : vector<2x128xf32>
    %38 = math.exp %37 : vector<2x128xf32>
    %cst_19 = arith.constant 1.000000e+00 : f32
    %39 = vector.broadcast %cst_19 : f32 to vector<2x128xf32>
    %40 = arith.addf %39, %38 : vector<2x128xf32>
    %41 = arith.divf %39, %40 : vector<2x128xf32>
    %42 = math.tanh %36 : vector<2x128xf32>
    %43 = vector.extract_strided_slice %41 {offsets = [0, 0], sizes = [2, 32], strides = [1, 1]} : vector<2x128xf32> to vector<2x32xf32>
    %44 = vector.extract_strided_slice %41 {offsets = [0, 32], sizes = [2, 32], strides = [1, 1]} : vector<2x128xf32> to vector<2x32xf32>
    %45 = vector.extract_strided_slice %42 {offsets = [0, 64], sizes = [2, 32], strides = [1, 1]} : vector<2x128xf32> to vector<2x32xf32>
    %46 = vector.extract_strided_slice %41 {offsets = [0, 96], sizes = [2, 32], strides = [1, 1]} : vector<2x128xf32> to vector<2x32xf32>
    %47 = arith.mulf %44, %11 : vector<2x32xf32>
    %48 = arith.mulf %43, %45 : vector<2x32xf32>
    %49 = arith.addf %47, %48 : vector<2x32xf32>
    %50 = math.tanh %49 : vector<2x32xf32>
    %51 = arith.mulf %46, %50 : vector<2x32xf32>
    %c1_i32 = arith.constant 1 : i32
    %52 = arith.index_cast %c1_i32 : i32 to index
    %c0_20 = arith.constant 0 : index
    %c0_21 = arith.constant 0 : index
    %53 = vector.load %arg2[%52, %c0_20, %c0_21] : memref<8x2x128xf32, #tpu.memory_space<vmem>>, vector<1x2x128xf32>
    %54 = vector.shape_cast %53 : vector<1x2x128xf32> to vector<2x128xf32>
    %55 = arith.truncf %32 : vector<2x32xf32> to vector<2x32xbf16>
    %cst_22 = arith.constant dense<0.000000e+00> : vector<2x128xf32>
    %56 = tpu.matmul %55, %3, %cst_22 {dimension_numbers = #tpu.dot_dimension_numbers<[1], [0], [0], [1], [0, 0, 1, 1], [], []>} : vector<2x32xbf16>, vector<32x128xbf16>, vector<2x128xf32> -> vector<2x128xf32>
    %57 = arith.addf %54, %56 : vector<2x128xf32>
    %58 = arith.negf %57 : vector<2x128xf32>
    %59 = math.exp %58 : vector<2x128xf32>
    %cst_23 = arith.constant 1.000000e+00 : f32
    %60 = vector.broadcast %cst_23 : f32 to vector<2x128xf32>
    %61 = arith.addf %60, %59 : vector<2x128xf32>
    %62 = arith.divf %60, %61 : vector<2x128xf32>
    %63 = math.tanh %57 : vector<2x128xf32>
    %64 = vector.extract_strided_slice %62 {offsets = [0, 0], sizes = [2, 32], strides = [1, 1]} : vector<2x128xf32> to vector<2x32xf32>
    %65 = vector.extract_strided_slice %62 {offsets = [0, 32], sizes = [2, 32], strides = [1, 1]} : vector<2x128xf32> to vector<2x32xf32>
    %66 = vector.extract_strided_slice %63 {offsets = [0, 64], sizes = [2, 32], strides = [1, 1]} : vector<2x128xf32> to vector<2x32xf32>
    %67 = vector.extract_strided_slice %62 {offsets = [0, 96], sizes = [2, 32], strides = [1, 1]} : vector<2x128xf32> to vector<2x32xf32>
    %68 = arith.mulf %65, %30 : vector<2x32xf32>
    %69 = arith.mulf %64, %66 : vector<2x32xf32>
    %70 = arith.addf %68, %69 : vector<2x32xf32>
    %71 = math.tanh %70 : vector<2x32xf32>
    %72 = arith.mulf %67, %71 : vector<2x32xf32>
    %73 = tpu.concatenate %72, %51 in 1 : vector<2x32xf32>, vector<2x32xf32> -> vector<2x64xf32>
    %74 = arith.truncf %73 : vector<2x64xf32> to vector<2x64xbf16>
    %cst_24 = arith.constant dense<0.000000e+00> : vector<2x128xf32>
    %75 = tpu.matmul %74, %4, %cst_24 {dimension_numbers = #tpu.dot_dimension_numbers<[1], [0], [0], [1], [0, 0, 1, 1], [], []>} : vector<2x64xbf16>, vector<64x128xbf16>, vector<2x128xf32> -> vector<2x128xf32>
    %76 = arith.addf %75, %7 : vector<2x128xf32>
    %77 = arith.negf %76 : vector<2x128xf32>
    %78 = math.exp %77 : vector<2x128xf32>
    %cst_25 = arith.constant 1.000000e+00 : f32
    %79 = vector.broadcast %cst_25 : f32 to vector<2x128xf32>
    %80 = arith.addf %79, %78 : vector<2x128xf32>
    %81 = arith.divf %79, %80 : vector<2x128xf32>
    %82 = math.tanh %76 : vector<2x128xf32>
    %83 = vector.extract_strided_slice %81 {offsets = [0, 0], sizes = [2, 32], strides = [1, 1]} : vector<2x128xf32> to vector<2x32xf32>
    %84 = vector.extract_strided_slice %81 {offsets = [0, 32], sizes = [2, 32], strides = [1, 1]} : vector<2x128xf32> to vector<2x32xf32>
    %85 = vector.extract_strided_slice %82 {offsets = [0, 64], sizes = [2, 32], strides = [1, 1]} : vector<2x128xf32> to vector<2x32xf32>
    %86 = vector.extract_strided_slice %81 {offsets = [0, 96], sizes = [2, 32], strides = [1, 1]} : vector<2x128xf32> to vector<2x32xf32>
    %87 = arith.mulf %84, %49 : vector<2x32xf32>
    %88 = arith.mulf %83, %85 : vector<2x32xf32>
    %89 = arith.addf %87, %88 : vector<2x32xf32>
    %90 = math.tanh %89 : vector<2x32xf32>
    %91 = arith.mulf %86, %90 : vector<2x32xf32>
    %c2_i32 = arith.constant 2 : i32
    %92 = arith.index_cast %c2_i32 : i32 to index
    %c0_26 = arith.constant 0 : index
    %c0_27 = arith.constant 0 : index
    %93 = vector.load %arg2[%92, %c0_26, %c0_27] : memref<8x2x128xf32, #tpu.memory_space<vmem>>, vector<1x2x128xf32>
    %94 = vector.shape_cast %93 : vector<1x2x128xf32> to vector<2x128xf32>
    %95 = arith.truncf %72 : vector<2x32xf32> to vector<2x32xbf16>
    %cst_28 = arith.constant dense<0.000000e+00> : vector<2x128xf32>
    %96 = tpu.matmul %95, %3, %cst_28 {dimension_numbers = #tpu.dot_dimension_numbers<[1], [0], [0], [1], [0, 0, 1, 1], [], []>} : vector<2x32xbf16>, vector<32x128xbf16>, vector<2x128xf32> -> vector<2x128xf32>
    %97 = arith.addf %94, %96 : vector<2x128xf32>
    %98 = arith.negf %97 : vector<2x128xf32>
    %99 = math.exp %98 : vector<2x128xf32>
    %cst_29 = arith.constant 1.000000e+00 : f32
    %100 = vector.broadcast %cst_29 : f32 to vector<2x128xf32>
    %101 = arith.addf %100, %99 : vector<2x128xf32>
    %102 = arith.divf %100, %101 : vector<2x128xf32>
    %103 = math.tanh %97 : vector<2x128xf32>
    %104 = vector.extract_strided_slice %102 {offsets = [0, 0], sizes = [2, 32], strides = [1, 1]} : vector<2x128xf32> to vector<2x32xf32>
    %105 = vector.extract_strided_slice %102 {offsets = [0, 32], sizes = [2, 32], strides = [1, 1]} : vector<2x128xf32> to vector<2x32xf32>
    %106 = vector.extract_strided_slice %103 {offsets = [0, 64], sizes = [2, 32], strides = [1, 1]} : vector<2x128xf32> to vector<2x32xf32>
    %107 = vector.extract_strided_slice %102 {offsets = [0, 96], sizes = [2, 32], strides = [1, 1]} : vector<2x128xf32> to vector<2x32xf32>
    %108 = arith.mulf %105, %70 : vector<2x32xf32>
    %109 = arith.mulf %104, %106 : vector<2x32xf32>
    %110 = arith.addf %108, %109 : vector<2x32xf32>
    %111 = math.tanh %110 : vector<2x32xf32>
    %112 = arith.mulf %107, %111 : vector<2x32xf32>
    %113 = tpu.concatenate %112, %91 in 1 : vector<2x32xf32>, vector<2x32xf32> -> vector<2x64xf32>
    %114 = arith.truncf %113 : vector<2x64xf32> to vector<2x64xbf16>
    %cst_30 = arith.constant dense<0.000000e+00> : vector<2x128xf32>
    %115 = tpu.matmul %114, %4, %cst_30 {dimension_numbers = #tpu.dot_dimension_numbers<[1], [0], [0], [1], [0, 0, 1, 1], [], []>} : vector<2x64xbf16>, vector<64x128xbf16>, vector<2x128xf32> -> vector<2x128xf32>
    %116 = arith.addf %115, %7 : vector<2x128xf32>
    %117 = arith.negf %116 : vector<2x128xf32>
    %118 = math.exp %117 : vector<2x128xf32>
    %cst_31 = arith.constant 1.000000e+00 : f32
    %119 = vector.broadcast %cst_31 : f32 to vector<2x128xf32>
    %120 = arith.addf %119, %118 : vector<2x128xf32>
    %121 = arith.divf %119, %120 : vector<2x128xf32>
    %122 = math.tanh %116 : vector<2x128xf32>
    %123 = vector.extract_strided_slice %121 {offsets = [0, 0], sizes = [2, 32], strides = [1, 1]} : vector<2x128xf32> to vector<2x32xf32>
    %124 = vector.extract_strided_slice %121 {offsets = [0, 32], sizes = [2, 32], strides = [1, 1]} : vector<2x128xf32> to vector<2x32xf32>
    %125 = vector.extract_strided_slice %122 {offsets = [0, 64], sizes = [2, 32], strides = [1, 1]} : vector<2x128xf32> to vector<2x32xf32>
    %126 = vector.extract_strided_slice %121 {offsets = [0, 96], sizes = [2, 32], strides = [1, 1]} : vector<2x128xf32> to vector<2x32xf32>
    %127 = arith.mulf %124, %89 : vector<2x32xf32>
    %128 = arith.mulf %123, %125 : vector<2x32xf32>
    %129 = arith.addf %127, %128 : vector<2x32xf32>
    %130 = math.tanh %129 : vector<2x32xf32>
    %131 = arith.mulf %126, %130 : vector<2x32xf32>
    %c3_i32 = arith.constant 3 : i32
    %132 = arith.index_cast %c3_i32 : i32 to index
    %c0_32 = arith.constant 0 : index
    %c0_33 = arith.constant 0 : index
    %133 = vector.load %arg2[%132, %c0_32, %c0_33] : memref<8x2x128xf32, #tpu.memory_space<vmem>>, vector<1x2x128xf32>
    %134 = vector.shape_cast %133 : vector<1x2x128xf32> to vector<2x128xf32>
    %135 = arith.truncf %112 : vector<2x32xf32> to vector<2x32xbf16>
    %cst_34 = arith.constant dense<0.000000e+00> : vector<2x128xf32>
    %136 = tpu.matmul %135, %3, %cst_34 {dimension_numbers = #tpu.dot_dimension_numbers<[1], [0], [0], [1], [0, 0, 1, 1], [], []>} : vector<2x32xbf16>, vector<32x128xbf16>, vector<2x128xf32> -> vector<2x128xf32>
    %137 = arith.addf %134, %136 : vector<2x128xf32>
    %138 = arith.negf %137 : vector<2x128xf32>
    %139 = math.exp %138 : vector<2x128xf32>
    %cst_35 = arith.constant 1.000000e+00 : f32
    %140 = vector.broadcast %cst_35 : f32 to vector<2x128xf32>
    %141 = arith.addf %140, %139 : vector<2x128xf32>
    %142 = arith.divf %140, %141 : vector<2x128xf32>
    %143 = math.tanh %137 : vector<2x128xf32>
    %144 = vector.extract_strided_slice %142 {offsets = [0, 0], sizes = [2, 32], strides = [1, 1]} : vector<2x128xf32> to vector<2x32xf32>
    %145 = vector.extract_strided_slice %142 {offsets = [0, 32], sizes = [2, 32], strides = [1, 1]} : vector<2x128xf32> to vector<2x32xf32>
    %146 = vector.extract_strided_slice %143 {offsets = [0, 64], sizes = [2, 32], strides = [1, 1]} : vector<2x128xf32> to vector<2x32xf32>
    %147 = vector.extract_strided_slice %142 {offsets = [0, 96], sizes = [2, 32], strides = [1, 1]} : vector<2x128xf32> to vector<2x32xf32>
    %148 = arith.mulf %145, %110 : vector<2x32xf32>
    %149 = arith.mulf %144, %146 : vector<2x32xf32>
    %150 = arith.addf %148, %149 : vector<2x32xf32>
    %151 = math.tanh %150 : vector<2x32xf32>
    %152 = arith.mulf %147, %151 : vector<2x32xf32>
    %153 = tpu.concatenate %152, %131 in 1 : vector<2x32xf32>, vector<2x32xf32> -> vector<2x64xf32>
    %154 = arith.truncf %153 : vector<2x64xf32> to vector<2x64xbf16>
    %cst_36 = arith.constant dense<0.000000e+00> : vector<2x128xf32>
    %155 = tpu.matmul %154, %4, %cst_36 {dimension_numbers = #tpu.dot_dimension_numbers<[1], [0], [0], [1], [0, 0, 1, 1], [], []>} : vector<2x64xbf16>, vector<64x128xbf16>, vector<2x128xf32> -> vector<2x128xf32>
    %156 = arith.addf %155, %7 : vector<2x128xf32>
    %157 = arith.negf %156 : vector<2x128xf32>
    %158 = math.exp %157 : vector<2x128xf32>
    %cst_37 = arith.constant 1.000000e+00 : f32
    %159 = vector.broadcast %cst_37 : f32 to vector<2x128xf32>
    %160 = arith.addf %159, %158 : vector<2x128xf32>
    %161 = arith.divf %159, %160 : vector<2x128xf32>
    %162 = math.tanh %156 : vector<2x128xf32>
    %163 = vector.extract_strided_slice %161 {offsets = [0, 0], sizes = [2, 32], strides = [1, 1]} : vector<2x128xf32> to vector<2x32xf32>
    %164 = vector.extract_strided_slice %161 {offsets = [0, 32], sizes = [2, 32], strides = [1, 1]} : vector<2x128xf32> to vector<2x32xf32>
    %165 = vector.extract_strided_slice %162 {offsets = [0, 64], sizes = [2, 32], strides = [1, 1]} : vector<2x128xf32> to vector<2x32xf32>
    %166 = vector.extract_strided_slice %161 {offsets = [0, 96], sizes = [2, 32], strides = [1, 1]} : vector<2x128xf32> to vector<2x32xf32>
    %167 = arith.mulf %164, %129 : vector<2x32xf32>
    %168 = arith.mulf %163, %165 : vector<2x32xf32>
    %169 = arith.addf %167, %168 : vector<2x32xf32>
    %170 = math.tanh %169 : vector<2x32xf32>
    %171 = arith.mulf %166, %170 : vector<2x32xf32>
    %c4_i32 = arith.constant 4 : i32
    %172 = arith.index_cast %c4_i32 : i32 to index
    %c0_38 = arith.constant 0 : index
    %c0_39 = arith.constant 0 : index
    %173 = vector.load %arg2[%172, %c0_38, %c0_39] : memref<8x2x128xf32, #tpu.memory_space<vmem>>, vector<1x2x128xf32>
    %174 = vector.shape_cast %173 : vector<1x2x128xf32> to vector<2x128xf32>
    %175 = arith.truncf %152 : vector<2x32xf32> to vector<2x32xbf16>
    %cst_40 = arith.constant dense<0.000000e+00> : vector<2x128xf32>
    %176 = tpu.matmul %175, %3, %cst_40 {dimension_numbers = #tpu.dot_dimension_numbers<[1], [0], [0], [1], [0, 0, 1, 1], [], []>} : vector<2x32xbf16>, vector<32x128xbf16>, vector<2x128xf32> -> vector<2x128xf32>
    %177 = arith.addf %174, %176 : vector<2x128xf32>
    %178 = arith.negf %177 : vector<2x128xf32>
    %179 = math.exp %178 : vector<2x128xf32>
    %cst_41 = arith.constant 1.000000e+00 : f32
    %180 = vector.broadcast %cst_41 : f32 to vector<2x128xf32>
    %181 = arith.addf %180, %179 : vector<2x128xf32>
    %182 = arith.divf %180, %181 : vector<2x128xf32>
    %183 = math.tanh %177 : vector<2x128xf32>
    %184 = vector.extract_strided_slice %182 {offsets = [0, 0], sizes = [2, 32], strides = [1, 1]} : vector<2x128xf32> to vector<2x32xf32>
    %185 = vector.extract_strided_slice %182 {offsets = [0, 32], sizes = [2, 32], strides = [1, 1]} : vector<2x128xf32> to vector<2x32xf32>
    %186 = vector.extract_strided_slice %183 {offsets = [0, 64], sizes = [2, 32], strides = [1, 1]} : vector<2x128xf32> to vector<2x32xf32>
    %187 = vector.extract_strided_slice %182 {offsets = [0, 96], sizes = [2, 32], strides = [1, 1]} : vector<2x128xf32> to vector<2x32xf32>
    %188 = arith.mulf %185, %150 : vector<2x32xf32>
    %189 = arith.mulf %184, %186 : vector<2x32xf32>
    %190 = arith.addf %188, %189 : vector<2x32xf32>
    %191 = math.tanh %190 : vector<2x32xf32>
    %192 = arith.mulf %187, %191 : vector<2x32xf32>
    %193 = tpu.concatenate %192, %171 in 1 : vector<2x32xf32>, vector<2x32xf32> -> vector<2x64xf32>
    %194 = arith.truncf %193 : vector<2x64xf32> to vector<2x64xbf16>
    %cst_42 = arith.constant dense<0.000000e+00> : vector<2x128xf32>
    %195 = tpu.matmul %194, %4, %cst_42 {dimension_numbers = #tpu.dot_dimension_numbers<[1], [0], [0], [1], [0, 0, 1, 1], [], []>} : vector<2x64xbf16>, vector<64x128xbf16>, vector<2x128xf32> -> vector<2x128xf32>
    %196 = arith.addf %195, %7 : vector<2x128xf32>
    %197 = arith.negf %196 : vector<2x128xf32>
    %198 = math.exp %197 : vector<2x128xf32>
    %cst_43 = arith.constant 1.000000e+00 : f32
    %199 = vector.broadcast %cst_43 : f32 to vector<2x128xf32>
    %200 = arith.addf %199, %198 : vector<2x128xf32>
    %201 = arith.divf %199, %200 : vector<2x128xf32>
    %202 = math.tanh %196 : vector<2x128xf32>
    %203 = vector.extract_strided_slice %201 {offsets = [0, 0], sizes = [2, 32], strides = [1, 1]} : vector<2x128xf32> to vector<2x32xf32>
    %204 = vector.extract_strided_slice %201 {offsets = [0, 32], sizes = [2, 32], strides = [1, 1]} : vector<2x128xf32> to vector<2x32xf32>
    %205 = vector.extract_strided_slice %202 {offsets = [0, 64], sizes = [2, 32], strides = [1, 1]} : vector<2x128xf32> to vector<2x32xf32>
    %206 = vector.extract_strided_slice %201 {offsets = [0, 96], sizes = [2, 32], strides = [1, 1]} : vector<2x128xf32> to vector<2x32xf32>
    %207 = arith.mulf %204, %169 : vector<2x32xf32>
    %208 = arith.mulf %203, %205 : vector<2x32xf32>
    %209 = arith.addf %207, %208 : vector<2x32xf32>
    %210 = math.tanh %209 : vector<2x32xf32>
    %211 = arith.mulf %206, %210 : vector<2x32xf32>
    %c5_i32 = arith.constant 5 : i32
    %212 = arith.index_cast %c5_i32 : i32 to index
    %c0_44 = arith.constant 0 : index
    %c0_45 = arith.constant 0 : index
    %213 = vector.load %arg2[%212, %c0_44, %c0_45] : memref<8x2x128xf32, #tpu.memory_space<vmem>>, vector<1x2x128xf32>
    %214 = vector.shape_cast %213 : vector<1x2x128xf32> to vector<2x128xf32>
    %215 = arith.truncf %192 : vector<2x32xf32> to vector<2x32xbf16>
    %cst_46 = arith.constant dense<0.000000e+00> : vector<2x128xf32>
    %216 = tpu.matmul %215, %3, %cst_46 {dimension_numbers = #tpu.dot_dimension_numbers<[1], [0], [0], [1], [0, 0, 1, 1], [], []>} : vector<2x32xbf16>, vector<32x128xbf16>, vector<2x128xf32> -> vector<2x128xf32>
    %217 = arith.addf %214, %216 : vector<2x128xf32>
    %218 = arith.negf %217 : vector<2x128xf32>
    %219 = math.exp %218 : vector<2x128xf32>
    %cst_47 = arith.constant 1.000000e+00 : f32
    %220 = vector.broadcast %cst_47 : f32 to vector<2x128xf32>
    %221 = arith.addf %220, %219 : vector<2x128xf32>
    %222 = arith.divf %220, %221 : vector<2x128xf32>
    %223 = math.tanh %217 : vector<2x128xf32>
    %224 = vector.extract_strided_slice %222 {offsets = [0, 0], sizes = [2, 32], strides = [1, 1]} : vector<2x128xf32> to vector<2x32xf32>
    %225 = vector.extract_strided_slice %222 {offsets = [0, 32], sizes = [2, 32], strides = [1, 1]} : vector<2x128xf32> to vector<2x32xf32>
    %226 = vector.extract_strided_slice %223 {offsets = [0, 64], sizes = [2, 32], strides = [1, 1]} : vector<2x128xf32> to vector<2x32xf32>
    %227 = vector.extract_strided_slice %222 {offsets = [0, 96], sizes = [2, 32], strides = [1, 1]} : vector<2x128xf32> to vector<2x32xf32>
    %228 = arith.mulf %225, %190 : vector<2x32xf32>
    %229 = arith.mulf %224, %226 : vector<2x32xf32>
    %230 = arith.addf %228, %229 : vector<2x32xf32>
    %231 = math.tanh %230 : vector<2x32xf32>
    %232 = arith.mulf %227, %231 : vector<2x32xf32>
    %233 = tpu.concatenate %232, %211 in 1 : vector<2x32xf32>, vector<2x32xf32> -> vector<2x64xf32>
    %234 = arith.truncf %233 : vector<2x64xf32> to vector<2x64xbf16>
    %cst_48 = arith.constant dense<0.000000e+00> : vector<2x128xf32>
    %235 = tpu.matmul %234, %4, %cst_48 {dimension_numbers = #tpu.dot_dimension_numbers<[1], [0], [0], [1], [0, 0, 1, 1], [], []>} : vector<2x64xbf16>, vector<64x128xbf16>, vector<2x128xf32> -> vector<2x128xf32>
    %236 = arith.addf %235, %7 : vector<2x128xf32>
    %237 = arith.negf %236 : vector<2x128xf32>
    %238 = math.exp %237 : vector<2x128xf32>
    %cst_49 = arith.constant 1.000000e+00 : f32
    %239 = vector.broadcast %cst_49 : f32 to vector<2x128xf32>
    %240 = arith.addf %239, %238 : vector<2x128xf32>
    %241 = arith.divf %239, %240 : vector<2x128xf32>
    %242 = math.tanh %236 : vector<2x128xf32>
    %243 = vector.extract_strided_slice %241 {offsets = [0, 0], sizes = [2, 32], strides = [1, 1]} : vector<2x128xf32> to vector<2x32xf32>
    %244 = vector.extract_strided_slice %241 {offsets = [0, 32], sizes = [2, 32], strides = [1, 1]} : vector<2x128xf32> to vector<2x32xf32>
    %245 = vector.extract_strided_slice %242 {offsets = [0, 64], sizes = [2, 32], strides = [1, 1]} : vector<2x128xf32> to vector<2x32xf32>
    %246 = vector.extract_strided_slice %241 {offsets = [0, 96], sizes = [2, 32], strides = [1, 1]} : vector<2x128xf32> to vector<2x32xf32>
    %247 = arith.mulf %244, %209 : vector<2x32xf32>
    %248 = arith.mulf %243, %245 : vector<2x32xf32>
    %249 = arith.addf %247, %248 : vector<2x32xf32>
    %250 = math.tanh %249 : vector<2x32xf32>
    %251 = arith.mulf %246, %250 : vector<2x32xf32>
    %c6_i32 = arith.constant 6 : i32
    %252 = arith.index_cast %c6_i32 : i32 to index
    %c0_50 = arith.constant 0 : index
    %c0_51 = arith.constant 0 : index
    %253 = vector.load %arg2[%252, %c0_50, %c0_51] : memref<8x2x128xf32, #tpu.memory_space<vmem>>, vector<1x2x128xf32>
    %254 = vector.shape_cast %253 : vector<1x2x128xf32> to vector<2x128xf32>
    %255 = arith.truncf %232 : vector<2x32xf32> to vector<2x32xbf16>
    %cst_52 = arith.constant dense<0.000000e+00> : vector<2x128xf32>
    %256 = tpu.matmul %255, %3, %cst_52 {dimension_numbers = #tpu.dot_dimension_numbers<[1], [0], [0], [1], [0, 0, 1, 1], [], []>} : vector<2x32xbf16>, vector<32x128xbf16>, vector<2x128xf32> -> vector<2x128xf32>
    %257 = arith.addf %254, %256 : vector<2x128xf32>
    %258 = arith.negf %257 : vector<2x128xf32>
    %259 = math.exp %258 : vector<2x128xf32>
    %cst_53 = arith.constant 1.000000e+00 : f32
    %260 = vector.broadcast %cst_53 : f32 to vector<2x128xf32>
    %261 = arith.addf %260, %259 : vector<2x128xf32>
    %262 = arith.divf %260, %261 : vector<2x128xf32>
    %263 = math.tanh %257 : vector<2x128xf32>
    %264 = vector.extract_strided_slice %262 {offsets = [0, 0], sizes = [2, 32], strides = [1, 1]} : vector<2x128xf32> to vector<2x32xf32>
    %265 = vector.extract_strided_slice %262 {offsets = [0, 32], sizes = [2, 32], strides = [1, 1]} : vector<2x128xf32> to vector<2x32xf32>
    %266 = vector.extract_strided_slice %263 {offsets = [0, 64], sizes = [2, 32], strides = [1, 1]} : vector<2x128xf32> to vector<2x32xf32>
    %267 = vector.extract_strided_slice %262 {offsets = [0, 96], sizes = [2, 32], strides = [1, 1]} : vector<2x128xf32> to vector<2x32xf32>
    %268 = arith.mulf %265, %230 : vector<2x32xf32>
    %269 = arith.mulf %264, %266 : vector<2x32xf32>
    %270 = arith.addf %268, %269 : vector<2x32xf32>
    %271 = math.tanh %270 : vector<2x32xf32>
    %272 = arith.mulf %267, %271 : vector<2x32xf32>
    %273 = tpu.concatenate %272, %251 in 1 : vector<2x32xf32>, vector<2x32xf32> -> vector<2x64xf32>
    %274 = arith.truncf %273 : vector<2x64xf32> to vector<2x64xbf16>
    %cst_54 = arith.constant dense<0.000000e+00> : vector<2x128xf32>
    %275 = tpu.matmul %274, %4, %cst_54 {dimension_numbers = #tpu.dot_dimension_numbers<[1], [0], [0], [1], [0, 0, 1, 1], [], []>} : vector<2x64xbf16>, vector<64x128xbf16>, vector<2x128xf32> -> vector<2x128xf32>
    %276 = arith.addf %275, %7 : vector<2x128xf32>
    %277 = arith.negf %276 : vector<2x128xf32>
    %278 = math.exp %277 : vector<2x128xf32>
    %cst_55 = arith.constant 1.000000e+00 : f32
    %279 = vector.broadcast %cst_55 : f32 to vector<2x128xf32>
    %280 = arith.addf %279, %278 : vector<2x128xf32>
    %281 = arith.divf %279, %280 : vector<2x128xf32>
    %282 = math.tanh %276 : vector<2x128xf32>
    %283 = vector.extract_strided_slice %281 {offsets = [0, 0], sizes = [2, 32], strides = [1, 1]} : vector<2x128xf32> to vector<2x32xf32>
    %284 = vector.extract_strided_slice %281 {offsets = [0, 32], sizes = [2, 32], strides = [1, 1]} : vector<2x128xf32> to vector<2x32xf32>
    %285 = vector.extract_strided_slice %282 {offsets = [0, 64], sizes = [2, 32], strides = [1, 1]} : vector<2x128xf32> to vector<2x32xf32>
    %286 = vector.extract_strided_slice %281 {offsets = [0, 96], sizes = [2, 32], strides = [1, 1]} : vector<2x128xf32> to vector<2x32xf32>
    %287 = arith.mulf %284, %249 : vector<2x32xf32>
    %288 = arith.mulf %283, %285 : vector<2x32xf32>
    %289 = arith.addf %287, %288 : vector<2x32xf32>
    %290 = math.tanh %289 : vector<2x32xf32>
    %291 = arith.mulf %286, %290 : vector<2x32xf32>
    %c7_i32 = arith.constant 7 : i32
    %292 = arith.index_cast %c7_i32 : i32 to index
    %c0_56 = arith.constant 0 : index
    %c0_57 = arith.constant 0 : index
    %293 = vector.load %arg2[%292, %c0_56, %c0_57] : memref<8x2x128xf32, #tpu.memory_space<vmem>>, vector<1x2x128xf32>
    %294 = vector.shape_cast %293 : vector<1x2x128xf32> to vector<2x128xf32>
    %295 = arith.truncf %272 : vector<2x32xf32> to vector<2x32xbf16>
    %cst_58 = arith.constant dense<0.000000e+00> : vector<2x128xf32>
    %296 = tpu.matmul %295, %3, %cst_58 {dimension_numbers = #tpu.dot_dimension_numbers<[1], [0], [0], [1], [0, 0, 1, 1], [], []>} : vector<2x32xbf16>, vector<32x128xbf16>, vector<2x128xf32> -> vector<2x128xf32>
    %297 = arith.addf %294, %296 : vector<2x128xf32>
    %298 = arith.negf %297 : vector<2x128xf32>
    %299 = math.exp %298 : vector<2x128xf32>
    %cst_59 = arith.constant 1.000000e+00 : f32
    %300 = vector.broadcast %cst_59 : f32 to vector<2x128xf32>
    %301 = arith.addf %300, %299 : vector<2x128xf32>
    %302 = arith.divf %300, %301 : vector<2x128xf32>
    %303 = math.tanh %297 : vector<2x128xf32>
    %304 = vector.extract_strided_slice %302 {offsets = [0, 0], sizes = [2, 32], strides = [1, 1]} : vector<2x128xf32> to vector<2x32xf32>
    %305 = vector.extract_strided_slice %302 {offsets = [0, 32], sizes = [2, 32], strides = [1, 1]} : vector<2x128xf32> to vector<2x32xf32>
    %306 = vector.extract_strided_slice %303 {offsets = [0, 64], sizes = [2, 32], strides = [1, 1]} : vector<2x128xf32> to vector<2x32xf32>
    %307 = vector.extract_strided_slice %302 {offsets = [0, 96], sizes = [2, 32], strides = [1, 1]} : vector<2x128xf32> to vector<2x32xf32>
    %308 = arith.mulf %305, %270 : vector<2x32xf32>
    %309 = arith.mulf %304, %306 : vector<2x32xf32>
    %310 = arith.addf %308, %309 : vector<2x32xf32>
    %311 = math.tanh %310 : vector<2x32xf32>
    %312 = arith.mulf %307, %311 : vector<2x32xf32>
    %313 = tpu.concatenate %312, %291 in 1 : vector<2x32xf32>, vector<2x32xf32> -> vector<2x64xf32>
    %314 = arith.truncf %313 : vector<2x64xf32> to vector<2x64xbf16>
    %cst_60 = arith.constant dense<0.000000e+00> : vector<2x128xf32>
    %315 = tpu.matmul %314, %4, %cst_60 {dimension_numbers = #tpu.dot_dimension_numbers<[1], [0], [0], [1], [0, 0, 1, 1], [], []>} : vector<2x64xbf16>, vector<64x128xbf16>, vector<2x128xf32> -> vector<2x128xf32>
    %316 = arith.addf %315, %7 : vector<2x128xf32>
    %317 = arith.negf %316 : vector<2x128xf32>
    %318 = math.exp %317 : vector<2x128xf32>
    %cst_61 = arith.constant 1.000000e+00 : f32
    %319 = vector.broadcast %cst_61 : f32 to vector<2x128xf32>
    %320 = arith.addf %319, %318 : vector<2x128xf32>
    %321 = arith.divf %319, %320 : vector<2x128xf32>
    %322 = math.tanh %316 : vector<2x128xf32>
    %323 = vector.extract_strided_slice %321 {offsets = [0, 0], sizes = [2, 32], strides = [1, 1]} : vector<2x128xf32> to vector<2x32xf32>
    %324 = vector.extract_strided_slice %321 {offsets = [0, 32], sizes = [2, 32], strides = [1, 1]} : vector<2x128xf32> to vector<2x32xf32>
    %325 = vector.extract_strided_slice %322 {offsets = [0, 64], sizes = [2, 32], strides = [1, 1]} : vector<2x128xf32> to vector<2x32xf32>
    %326 = vector.extract_strided_slice %321 {offsets = [0, 96], sizes = [2, 32], strides = [1, 1]} : vector<2x128xf32> to vector<2x32xf32>
    %327 = arith.mulf %324, %289 : vector<2x32xf32>
    %328 = arith.mulf %323, %325 : vector<2x32xf32>
    %329 = arith.addf %327, %328 : vector<2x32xf32>
    %330 = math.tanh %329 : vector<2x32xf32>
    %331 = arith.mulf %326, %330 : vector<2x32xf32>
    %c8_i32 = arith.constant 8 : i32
    %c0_62 = arith.constant 0 : index
    %c0_63 = arith.constant 0 : index
    %332 = vector.load %arg7[%c0_62, %c0_63] : memref<2x32xf32, #tpu.memory_space<vmem>>, vector<2x32xf32>
    tpu.vector_store %arg7[%c0_62, %c0_63], %312 {strides = array<i32>} : memref<2x32xf32, #tpu.memory_space<vmem>>, vector<2x32xf32>,
    %c0_64 = arith.constant 0 : index
    %c0_65 = arith.constant 0 : index
    %333 = vector.load %arg8[%c0_64, %c0_65] : memref<2x32xf32, #tpu.memory_space<vmem>>, vector<2x32xf32>
    tpu.vector_store %arg8[%c0_64, %c0_65], %310 {strides = array<i32>} : memref<2x32xf32, #tpu.memory_space<vmem>>, vector<2x32xf32>,
    %c0_66 = arith.constant 0 : index
    %c0_67 = arith.constant 0 : index
    %334 = vector.load %arg9[%c0_66, %c0_67] : memref<2x32xf32, #tpu.memory_space<vmem>>, vector<2x32xf32>
    tpu.vector_store %arg9[%c0_66, %c0_67], %331 {strides = array<i32>} : memref<2x32xf32, #tpu.memory_space<vmem>>, vector<2x32xf32>,
    %c0_68 = arith.constant 0 : index
    %c0_69 = arith.constant 0 : index
    %335 = vector.load %arg10[%c0_68, %c0_69] : memref<2x32xf32, #tpu.memory_space<vmem>>, vector<2x32xf32>
    tpu.vector_store %arg10[%c0_68, %c0_69], %329 {strides = array<i32>} : memref<2x32xf32, #tpu.memory_space<vmem>>, vector<2x32xf32>,
    %c0_i32_70 = arith.constant 0 : i32
    %336 = arith.cmpi eq, %arg1, %c0_i32_70 : i32
    %337 = arith.extui %336 : i1 to i32
    %c0_i32_71 = arith.constant 0 : i32
    %338 = arith.cmpi ne, %337, %c0_i32_71 : i32
    scf.if %338 {
      %c0_72 = arith.constant 0 : index
      %c0_73 = arith.constant 0 : index
      %339 = vector.load %arg6[%c0_72, %c0_73] : memref<2x32xf32, #tpu.memory_space<vmem>>, vector<2x32xf32>
      tpu.vector_store %arg6[%c0_72, %c0_73], %331 {strides = array<i32>} : memref<2x32xf32, #tpu.memory_space<vmem>>, vector<2x32xf32>,
    } else {
    }
    return
  }
  func.func @transform_0(%arg0: i32, %arg1: i32) -> (i32, i32, i32) {
    %c0_i32 = arith.constant 0 : i32
    %c0_i32_0 = arith.constant 0 : i32
    return %arg1, %arg0, %c0_i32 : i32, i32, i32
  }
  func.func @transform_1(%arg0: i32, %arg1: i32) -> (i32, i32) {
    %c0_i32 = arith.constant 0 : i32
    %c0_i32_0 = arith.constant 0 : i32
    %c0_i32_1 = arith.constant 0 : i32
    return %c0_i32, %c0_i32_0 : i32, i32
  }
  func.func @transform_2(%arg0: i32, %arg1: i32) -> (i32, i32) {
    %c0_i32 = arith.constant 0 : i32
    %c0_i32_0 = arith.constant 0 : i32
    %c0_i32_1 = arith.constant 0 : i32
    return %c0_i32, %c0_i32_0 : i32, i32
  }
  func.func @transform_3(%arg0: i32, %arg1: i32) -> (i32, i32) {
    %c0_i32 = arith.constant 0 : i32
    %c0_i32_0 = arith.constant 0 : i32
    %c0_i32_1 = arith.constant 0 : i32
    return %c0_i32, %c0_i32_0 : i32, i32
  }
  func.func @transform_4(%arg0: i32, %arg1: i32) -> (i32, i32) {
    %c0_i32 = arith.constant 0 : i32
    %c0_i32_0 = arith.constant 0 : i32
    return %arg0, %c0_i32 : i32, i32
  }
}

</mosaic_0001>

<llo_original>
// kernel: tpu_custom_call.1
$region0: #{tpu_custom_call.1}
  #allocation0 [shape = 'u32[]', space=smem, size = 0x4, offset = 0x4, fixed_abs, tag = 'smem constant byte address 0x4 - core index']
  #allocation1 [shape = 'u32[144,128]{1,0:T(1,128)}', space=vmem, size = 0x12000, scoped, tag = 'internal scratch']
  #allocation2 [shape = 'f32[2,32]{1,0:T(2,128)}', space=vmem, size = 0x400, scoped, tag = 'scratch operand']
  #allocation3 [shape = 'f32[2,32]{1,0:T(2,128)}', space=vmem, size = 0x400, scoped, tag = 'scratch operand']
  #allocation4 [shape = 'f32[2,32]{1,0:T(2,128)}', space=vmem, size = 0x400, scoped, tag = 'scratch operand']
  #allocation5 [shape = 'f32[2,32]{1,0:T(2,128)}', space=vmem, size = 0x400, scoped, tag = 'scratch operand']
  %s0 = inlined_call_operand.hbm [shape: f32[8,2,128], index: 0, kind: input, shape index: {}]
  %s1 = inlined_call_operand.hbm [shape: bf16[32,128], index: 1, kind: input, shape index: {}]
  %s2 = inlined_call_operand.hbm [shape: bf16[64,128], index: 2, kind: input, shape index: {}]
  %s3 = inlined_call_operand.vmem [shape: f32[1,128], index: 3, kind: input, shape index: {}]
  %s4 = inlined_call_operand.hbm [shape: f32[2,32], index: 4, kind: output, shape index: {}]
  %s5 = sld [smem:[#allocation0]]
  $region46: #{tpu_custom_call.1} parent=0
    _
  %s7 = ssub.s32 1, %s5
  %s8 = scalar_select 0, %s7, %s5
  $region1: #{tpu_custom_call.1} parent=0
    #allocation6 [shape = 'u8[8192]{0}', space=vmem, size = 0x2000, scoped, tag = 'input window, operand 0, single buffered']
    #allocation7 [shape = 's32[1]{0}', space=sflag, size = 0x4, scoped, tag = 'scoped memory for tpu_custom_call.1']
    #allocation8 [shape = 's32[1]{0}', space=sflag, size = 0x4, scoped, tag = 'scoped memory for tpu_custom_call.1']
    #allocation9 [shape = 'u8[8192]{0}', space=vmem, size = 0x2000, scoped, tag = 'input window, operand 1, single buffered']
    #allocation10 [shape = 's32[1]{0}', space=sflag, size = 0x4, scoped, tag = 'scoped memory for tpu_custom_call.1']
    #allocation11 [shape = 'u8[16384]{0}', space=vmem, size = 0x4000, scoped, tag = 'input window, operand 2, single buffered']
    #allocation12 [shape = 'u8[1024]{0}', space=vmem, size = 0x400, scoped, tag = 'output window, operand 0, single buffered']
    %9 = vsyncpa [#allocation7], 0
    %10 = vsyncpa [#allocation10], 0
    %11 = vsyncpa [#allocation8], 0
    // Predicated region
    $region2: #{tpu_custom_call.1} parent=1 // pred_check
      _
    $region3: #{tpu_custom_call.1} parent=1 // pred_check_branch
      %13 = sbr.rel (0) target = $region5
    $region4: #{tpu_custom_call.1} parent=1 // pred_region
      %s15 = ssub.s32 256, 256
      %16 = vsyncadd [#allocation7], %s15
      %s17 = sshll.u32 [#allocation6], 4
      %s18 = int_to_ptr.vmem [resolvable:$true] %s17
      %23 = dma.hbm_to_vmem [thread:$0]  %s0, 256, %s18, [#allocation7], 32, 32, 2
    $region5: #{tpu_custom_call.1} parent=1 // pred_fallthru
      _
    // Predicated region
    $region6: #{tpu_custom_call.1} parent=1 // pred_check
      _
    $region7: #{tpu_custom_call.1} parent=1 // pred_check_branch
      %25 = sbr.rel (0) target = $region9
    $region8: #{tpu_custom_call.1} parent=1 // pred_region
      %s27 = ssub.s32 256, 256
      %28 = vsyncadd [#allocation10], %s27
      %s29 = sshll.u32 [#allocation9], 4
      %s30 = int_to_ptr.vmem [resolvable:$true] %s29
      %35 = dma.hbm_to_vmem [thread:$0]  %s1, 256, %s30, [#allocation10], 64, 64, 4
    $region9: #{tpu_custom_call.1} parent=1 // pred_fallthru
      _
    // Predicated region
    $region10: #{tpu_custom_call.1} parent=1 // pred_check
      _
    $region11: #{tpu_custom_call.1} parent=1 // pred_check_branch
      %37 = sbr.rel (0) target = $region13
    $region12: #{tpu_custom_call.1} parent=1 // pred_region
      %s39 = ssub.s32 512, 512
      %40 = vsyncadd [#allocation10], %s39
      %s41 = sshll.u32 [#allocation11], 4
      %s42 = int_to_ptr.vmem [resolvable:$true] %s41
      %47 = dma.hbm_to_vmem [thread:$0]  %s2, 512, %s42, [#allocation10], 64, 64, 4
    $region13: #{tpu_custom_call.1} parent=1 // pred_fallthru
      _
    // Predicated region
    $region14: #{tpu_custom_call.1} parent=1 // pred_check
      _
    $region15: #{tpu_custom_call.1} parent=1 // pred_check_branch
      %49 = sbr.rel (0) target = $region17
    $region16: #{tpu_custom_call.1} parent=1 // pred_region
      _
    $region17: #{tpu_custom_call.1} parent=1 // pred_fallthru
      _
    // Predicated region
    $region18: #{tpu_custom_call.1} parent=1 // pred_check
      _
    $region19: #{tpu_custom_call.1} parent=1 // pred_check_branch
      %51 = sbr.rel (0) target = $region21
    $region20: #{tpu_custom_call.1} parent=1 // pred_region
      %52 = dma.done [#allocation7], 256
    $region21: #{tpu_custom_call.1} parent=1 // pred_fallthru
      _
    // Predicated region
    $region22: #{tpu_custom_call.1} parent=1 // pred_check
      _
    $region23: #{tpu_custom_call.1} parent=1 // pred_check_branch
      %54 = sbr.rel (0) target = $region25
    $region24: #{tpu_custom_call.1} parent=1 // pred_region
      %55 = dma.done [#allocation10], 256
    $region25: #{tpu_custom_call.1} parent=1 // pred_fallthru
      _
    // Predicated region
    $region26: #{tpu_custom_call.1} parent=1 // pred_check
      _
    $region27: #{tpu_custom_call.1} parent=1 // pred_check_branch
      %57 = sbr.rel (0) target = $region29
    $region28: #{tpu_custom_call.1} parent=1 // pred_region
      %58 = dma.done [#allocation10], 512
    $region29: #{tpu_custom_call.1} parent=1 // pred_fallthru
      _
    %p60 = scmp.eq.s32.totalorder 0, 0
    // Predicated region
    $region30: #{tpu_custom_call.1} parent=1 // pred_check
      %p61 = pneg %p60
    $region31: #{tpu_custom_call.1} parent=1 // pred_check_branch
      %63 = sbr.rel (%p61) target = $region33
    $region32: #{tpu_custom_call.1} parent=1 // pred_region
      %vm64 = vcmask 254976
      %65 = vst.msk [vmem:[#allocation2] sm:$0x3] %vm64, 0.0
      %66 = vst.msk [vmem:[#allocation3] sm:$0x3] %vm64, 0.0
      %67 = vst.msk [vmem:[#allocation4] sm:$0x3] %vm64, 0.0
      %68 = vst.msk [vmem:[#allocation5] sm:$0x3] %vm64, 0.0
    $region33: #{tpu_custom_call.1} parent=1 // pred_fallthru
      _
    %v69 = vld [vmem:[#allocation9] sm:$0xf]
    %v70 = vld [vmem:[#allocation9 + $0x4] sm:$0xf]
    %v71 = vld [vmem:[#allocation9 + $0x8] sm:$0xf]
    %v72 = vld [vmem:[#allocation9 + $0xc] sm:$0xf]
    %v73 = vld [vmem:[#allocation11] sm:$0xf]
    %v74 = vld [vmem:[#allocation11 + $0x4] sm:$0xf]
    %v75 = vld [vmem:[#allocation11 + $0x8] sm:$0xf]
    %v76 = vld [vmem:[#allocation11 + $0xc] sm:$0xf]
    %v77 = vld [vmem:[#allocation11 + $0x10] sm:$0xf]
    %v78 = vld [vmem:[#allocation11 + $0x14] sm:$0xf]
    %v79 = vld [vmem:[#allocation11 + $0x18] sm:$0xf]
    %v80 = vld [vmem:[#allocation11 + $0x1c] sm:$0xf]
    %v81 = vld [vmem:[%s3] sm:$0x1]
    %v83 = vlaneseq
    %v84 = vshrl.u32 %v83, 7
    %v85 = vsub.s32 0, %v84
    %v86 = vrot.slane %v81, %v85
    %v88 = vld [vmem:[#allocation2] sm:$0x3]
    %v89 = vld [vmem:[#allocation3] sm:$0x3]
    %v90 = vld [vmem:[#allocation4] sm:$0x3]
    %v91 = vld [vmem:[#allocation5] sm:$0x3]
    %v92 = vld [vmem:[#allocation6] sm:$0x3]
    %v93 = vpack.c.bf16 %v88, %v88
    %v98 = vunpack.c.l.b16 %v69
    %v99 = vunpack.c.l.b16 %v70
    %v100 = vunpack.c.l.b16 %v71
    %v101 = vunpack.c.l.b16 %v72
    %v102 = vpack.c.b16 %v99, %v98
    %v103 = vpack.c.b16 %v101, %v100
    %vm106 = vcmask 261120
    %v108 = vsel %vm106, %v93, 0
    %110 = vmatprep.subr.bf16.mxu0 0
    %111 = vmatpush1.bf16.msra.mxu0 0
    %112 = vmatprep.subr.bf16.mxu0 0
    %113 = vmatpush1.bf16.msra.mxu0 0
    %114 = vmatprep.subr.bf16.mxu0 0
    %115 = vmatpush1.bf16.msra.mxu0 0
    %116 = vmatprep.subr.bf16.mxu0 0
    %117 = vmatpush1.bf16.msra.mxu0 0
    %118 = vmatprep.subr.bf16.mxu0 0
    %119 = vmatpush1.bf16.msra.mxu0 0
    %120 = vmatprep.subr.bf16.mxu0 0
    %121 = vmatpush1.bf16.msra.mxu0 0
    %122 = vmatprep.subr.bf16.mxu0 0
    %123 = vmatpush1.bf16.msra.mxu0 %v103
    %124 = vmatprep.subr.bf16.mxu0 0
    %125 = vmatpush1.bf16.msra.mxu0 %v102
    %126 = vmatprep.subr.bf16.mxu0 0
    %127 = vmatpush2.bf16.msra.mxu0 0
    %128 = vmatprep.subr.bf16.mxu0 0
    %129 = vmatpush2.bf16.msra.mxu0 0
    %130 = vmatprep.subr.bf16.mxu0 0
    %131 = vmatpush2.bf16.msra.mxu0 0
    %132 = vmatprep.subr.bf16.mxu0 0
    %133 = vmatpush2.bf16.msra.mxu0 0
    %134 = vmatprep.subr.bf16.mxu0 0
    %135 = vmatpush2.bf16.msra.mxu0 0
    %136 = vmatprep.subr.bf16.mxu0 0
    %137 = vmatpush2.bf16.msra.mxu0 0
    %138 = vmatprep.subr.bf16.mxu0 0
    %139 = vmatpush2.bf16.msra.mxu0 0
    %140 = vmatprep.subr.bf16.mxu0 0
    %141 = vmatpush2.bf16.msra.mxu0 0
    %142 = vmatprep.mubr.bf16.mxu0 0
    %143 = vmatmul.mubr.bf16.gmra.mxu0 %v108
    %v144 = vpop.f32.mrf.mxu0
    %v145 = vadd.f32 0.0, %v144
    %v146 = vpop.f32.mrf.mxu0
    %v147 = vpop.f32.mrf.mxu0
    %v148 = vpop.f32.mrf.mxu0
    %149 = vdwg.mxu0
    %v150 = vadd.f32 %v92, %v145
    %v151 = vxor.u32 %v150, 2147483648
    %v152 = vmul.f32 %v151, 1.442695
    %v153 = vpow.pop %v152
    %v154 = vadd.f32 %v153, 1.0
    %v155 = vrcp.pop %v154
    %v156 = vmul.f32 1.0, %v155
    %v157 = vtanh.pop %v150
    %159 = vrot.lane.b32.xlu0 %v89, 32
    %v160 = vpop.permute.xlu0 %159
    %v162 = vmul.f32 %v156, %v160
    %164 = vrot.lane.b32.xlu0 %v157, 64
    %v165 = vpop.permute.xlu0 %164
    %v167 = vmul.f32 %v156, %v165
    %169 = vrot.lane.b32.xlu0 %v167, 32
    %v170 = vpop.permute.xlu0 %169
    %v172 = vadd.f32 %v162, %v170
    %v173 = vtanh.pop %v172
    %175 = vrot.lane.b32.xlu0 %v173, 64
    %v176 = vpop.permute.xlu0 %175
    %v178 = vmul.f32 %v156, %v176
    %180 = vrot.lane.b32.xlu0 %v178, 32
    %v181 = vpop.permute.xlu0 %180
    %184 = vrot.lane.b32.xlu0 %v90, 32
    %v185 = vpop.permute.xlu0 %184
    %v187 = vsel %vm106, %v181, %v185
    %v188 = vpack.c.bf16 %v187, %v187
    %v197 = vunpack.c.l.b16 %v73
    %v198 = vunpack.c.l.b16 %v74
    %v199 = vunpack.c.l.b16 %v75
    %v200 = vunpack.c.l.b16 %v76
    %v201 = vunpack.c.l.b16 %v77
    %v202 = vunpack.c.l.b16 %v78
    %v203 = vunpack.c.l.b16 %v79
    %v204 = vunpack.c.l.b16 %v80
    %v205 = vpack.c.b16 %v198, %v197
    %v206 = vpack.c.b16 %v200, %v199
    %v207 = vpack.c.b16 %v202, %v201
    %v208 = vpack.c.b16 %v204, %v203
    %vm213 = vcmask 523264
    %v215 = vsel %vm213, %v188, 0
    %217 = vmatprep.subr.bf16.mxu0 0
    %218 = vmatpush1.bf16.msra.mxu0 0
    %219 = vmatprep.subr.bf16.mxu0 0
    %220 = vmatpush1.bf16.msra.mxu0 0
    %221 = vmatprep.subr.bf16.mxu0 0
    %222 = vmatpush1.bf16.msra.mxu0 0
    %223 = vmatprep.subr.bf16.mxu0 0
    %224 = vmatpush1.bf16.msra.mxu0 0
    %225 = vmatprep.subr.bf16.mxu0 0
    %226 = vmatpush1.bf16.msra.mxu0 %v208
    %227 = vmatprep.subr.bf16.mxu0 0
    %228 = vmatpush1.bf16.msra.mxu0 %v207
    %229 = vmatprep.subr.bf16.mxu0 0
    %230 = vmatpush1.bf16.msra.mxu0 %v206
    %231 = vmatprep.subr.bf16.mxu0 0
    %232 = vmatpush1.bf16.msra.mxu0 %v205
    %233 = vmatprep.subr.bf16.mxu0 0
    %234 = vmatpush2.bf16.msra.mxu0 0
    %235 = vmatprep.subr.bf16.mxu0 0
    %236 = vmatpush2.bf16.msra.mxu0 0
    %237 = vmatprep.subr.bf16.mxu0 0
    %238 = vmatpush2.bf16.msra.mxu0 0
    %239 = vmatprep.subr.bf16.mxu0 0
    %240 = vmatpush2.bf16.msra.mxu0 0
    %241 = vmatprep.subr.bf16.mxu0 0
    %242 = vmatpush2.bf16.msra.mxu0 0
    %243 = vmatprep.subr.bf16.mxu0 0
    %244 = vmatpush2.bf16.msra.mxu0 0
    %245 = vmatprep.subr.bf16.mxu0 0
    %246 = vmatpush2.bf16.msra.mxu0 0
    %247 = vmatprep.subr.bf16.mxu0 0
    %248 = vmatpush2.bf16.msra.mxu0 0
    %249 = vmatprep.mubr.bf16.mxu0 0
    %250 = vmatmul.mubr.bf16.gmra.mxu0 %v215
    %v251 = vpop.f32.mrf.mxu0
    %v252 = vadd.f32 %v86, %v251
    %v253 = vpop.f32.mrf.mxu0
    %v254 = vpop.f32.mrf.mxu0
    %v255 = vpop.f32.mrf.mxu0
    %256 = vdwg.mxu0
    %v257 = vxor.u32 %v252, 2147483648
    %v258 = vmul.f32 %v257, 1.442695
    %v259 = vpow.pop %v258
    %v260 = vadd.f32 %v259, 1.0
    %v261 = vrcp.pop %v260
    %v262 = vmul.f32 1.0, %v261
    %v263 = vtanh.pop %v252
    %265 = vrot.lane.b32.xlu0 %v91, 32
    %v266 = vpop.permute.xlu0 %265
    %v268 = vmul.f32 %v262, %v266
    %270 = vrot.lane.b32.xlu0 %v263, 64
    %v271 = vpop.permute.xlu0 %270
    %v273 = vmul.f32 %v262, %v271
    %275 = vrot.lane.b32.xlu0 %v273, 32
    %v276 = vpop.permute.xlu0 %275
    %v278 = vadd.f32 %v268, %v276
    %v279 = vtanh.pop %v278
    %281 = vrot.lane.b32.xlu0 %v279, 64
    %v282 = vpop.permute.xlu0 %281
    %v284 = vmul.f32 %v262, %v282
    %s285 = scalar_lea.vmem [#allocation6], 2
    %v286 = vld [vmem:[%s285] sm:$0x3]
    %v287 = vpack.c.bf16 %v178, %v178
    %289 = vrot.lane.b32.xlu0 %v287, 32
    %v290 = vpop.permute.xlu0 %289
    %v292 = vsel %vm106, %v290, 0
    %294 = vmatprep.subr.bf16.mxu0 0
    %295 = vmatpush1.bf16.msra.mxu0 0
    %296 = vmatprep.subr.bf16.mxu0 0
    %297 = vmatpush1.bf16.msra.mxu0 0
    %298 = vmatprep.subr.bf16.mxu0 0
    %299 = vmatpush1.bf16.msra.mxu0 0
    %300 = vmatprep.subr.bf16.mxu0 0
    %301 = vmatpush1.bf16.msra.mxu0 0
    %302 = vmatprep.subr.bf16.mxu0 0
    %303 = vmatpush1.bf16.msra.mxu0 0
    %304 = vmatprep.subr.bf16.mxu0 0
    %305 = vmatpush1.bf16.msra.mxu0 0
    %306 = vmatprep.subr.bf16.mxu0 0
    %307 = vmatpush1.bf16.msra.mxu0 %v103
    %308 = vmatprep.subr.bf16.mxu0 0
    %309 = vmatpush1.bf16.msra.mxu0 %v102
    %310 = vmatprep.subr.bf16.mxu0 0
    %311 = vmatpush2.bf16.msra.mxu0 0
    %312 = vmatprep.subr.bf16.mxu0 0
    %313 = vmatpush2.bf16.msra.mxu0 0
    %314 = vmatprep.subr.bf16.mxu0 0
    %315 = vmatpush2.bf16.msra.mxu0 0
    %316 = vmatprep.subr.bf16.mxu0 0
    %317 = vmatpush2.bf16.msra.mxu0 0
    %318 = vmatprep.subr.bf16.mxu0 0
    %319 = vmatpush2.bf16.msra.mxu0 0
    %320 = vmatprep.subr.bf16.mxu0 0
    %321 = vmatpush2.bf16.msra.mxu0 0
    %322 = vmatprep.subr.bf16.mxu0 0
    %323 = vmatpush2.bf16.msra.mxu0 0
    %324 = vmatprep.subr.bf16.mxu0 0
    %325 = vmatpush2.bf16.msra.mxu0 0
    %326 = vmatprep.mubr.bf16.mxu0 0
    %327 = vmatmul.mubr.bf16.gmra.mxu0 %v292
    %v328 = vpop.f32.mrf.mxu0
    %v329 = vadd.f32 0.0, %v328
    %v330 = vpop.f32.mrf.mxu0
    %v331 = vpop.f32.mrf.mxu0
    %v332 = vpop.f32.mrf.mxu0
    %333 = vdwg.mxu0
    %v334 = vadd.f32 %v286, %v329
    %v335 = vxor.u32 %v334, 2147483648
    %v336 = vmul.f32 %v335, 1.442695
    %v337 = vpow.pop %v336
    %v338 = vadd.f32 %v337, 1.0
    %v339 = vrcp.pop %v338
    %v340 = vmul.f32 1.0, %v339
    %v341 = vtanh.pop %v334
    %v342 = vmul.f32 %v340, %v172
    %344 = vrot.lane.b32.xlu0 %v341, 64
    %v345 = vpop.permute.xlu0 %344
    %v347 = vmul.f32 %v340, %v345
    %349 = vrot.lane.b32.xlu0 %v347, 32
    %v350 = vpop.permute.xlu0 %349
    %v352 = vadd.f32 %v342, %v350
    %v353 = vtanh.pop %v352
    %355 = vrot.lane.b32.xlu0 %v353, 64
    %v356 = vpop.permute.xlu0 %355
    %v358 = vmul.f32 %v340, %v356
    %360 = vrot.lane.b32.xlu0 %v358, 32
    %v361 = vpop.permute.xlu0 %360
    %364 = vrot.lane.b32.xlu0 %v284, 64
    %v365 = vpop.permute.xlu0 %364
    %v367 = vsel %vm106, %v361, %v365
    %v368 = vpack.c.bf16 %v367, %v367
    %v370 = vsel %vm213, %v368, 0
    %372 = vmatprep.subr.bf16.mxu0 0
    %373 = vmatpush1.bf16.msra.mxu0 0
    %374 = vmatprep.subr.bf16.mxu0 0
    %375 = vmatpush1.bf16.msra.mxu0 0
    %376 = vmatprep.subr.bf16.mxu0 0
    %377 = vmatpush1.bf16.msra.mxu0 0
    %378 = vmatprep.subr.bf16.mxu0 0
    %379 = vmatpush1.bf16.msra.mxu0 0
    %380 = vmatprep.subr.bf16.mxu0 0
    %381 = vmatpush1.bf16.msra.mxu0 %v208
    %382 = vmatprep.subr.bf16.mxu0 0
    %383 = vmatpush1.bf16.msra.mxu0 %v207
    %384 = vmatprep.subr.bf16.mxu0 0
    %385 = vmatpush1.bf16.msra.mxu0 %v206
    %386 = vmatprep.subr.bf16.mxu0 0
    %387 = vmatpush1.bf16.msra.mxu0 %v205
    %388 = vmatprep.subr.bf16.mxu0 0
    %389 = vmatpush2.bf16.msra.mxu0 0
    %390 = vmatprep.subr.bf16.mxu0 0
    %391 = vmatpush2.bf16.msra.mxu0 0
    %392 = vmatprep.subr.bf16.mxu0 0
    %393 = vmatpush2.bf16.msra.mxu0 0
    %394 = vmatprep.subr.bf16.mxu0 0
    %395 = vmatpush2.bf16.msra.mxu0 0
    %396 = vmatprep.subr.bf16.mxu0 0
    %397 = vmatpush2.bf16.msra.mxu0 0
    %398 = vmatprep.subr.bf16.mxu0 0
    %399 = vmatpush2.bf16.msra.mxu0 0
    %400 = vmatprep.subr.bf16.mxu0 0
    %401 = vmatpush2.bf16.msra.mxu0 0
    %402 = vmatprep.subr.bf16.mxu0 0
    %403 = vmatpush2.bf16.msra.mxu0 0
    %404 = vmatprep.mubr.bf16.mxu0 0
    %405 = vmatmul.mubr.bf16.gmra.mxu0 %v370
    %v406 = vpop.f32.mrf.mxu0
    %v407 = vadd.f32 %v86, %v406
    %v408 = vpop.f32.mrf.mxu0
    %v409 = vpop.f32.mrf.mxu0
    %v410 = vpop.f32.mrf.mxu0
    %411 = vdwg.mxu0
    %v412 = vxor.u32 %v407, 2147483648
    %v413 = vmul.f32 %v412, 1.442695
    %v414 = vpow.pop %v413
    %v415 = vadd.f32 %v414, 1.0
    %v416 = vrcp.pop %v415
    %v417 = vmul.f32 1.0, %v416
    %v418 = vtanh.pop %v407
    %v419 = vmul.f32 %v417, %v278
    %421 = vrot.lane.b32.xlu0 %v418, 64
    %v422 = vpop.permute.xlu0 %421
    %v424 = vmul.f32 %v417, %v422
    %426 = vrot.lane.b32.xlu0 %v424, 32
    %v427 = vpop.permute.xlu0 %426
    %v429 = vadd.f32 %v419, %v427
    %v430 = vtanh.pop %v429
    %432 = vrot.lane.b32.xlu0 %v430, 64
    %v433 = vpop.permute.xlu0 %432
    %v435 = vmul.f32 %v417, %v433
    %s436 = scalar_lea.vmem [#allocation6], 4
    %v437 = vld [vmem:[%s436] sm:$0x3]
    %v438 = vpack.c.bf16 %v358, %v358
    %440 = vrot.lane.b32.xlu0 %v438, 32
    %v441 = vpop.permute.xlu0 %440
    %v443 = vsel %vm106, %v441, 0
    %445 = vmatprep.subr.bf16.mxu0 0
    %446 = vmatpush1.bf16.msra.mxu0 0
    %447 = vmatprep.subr.bf16.mxu0 0
    %448 = vmatpush1.bf16.msra.mxu0 0
    %449 = vmatprep.subr.bf16.mxu0 0
    %450 = vmatpush1.bf16.msra.mxu0 0
    %451 = vmatprep.subr.bf16.mxu0 0
    %452 = vmatpush1.bf16.msra.mxu0 0
    %453 = vmatprep.subr.bf16.mxu0 0
    %454 = vmatpush1.bf16.msra.mxu0 0
    %455 = vmatprep.subr.bf16.mxu0 0
    %456 = vmatpush1.bf16.msra.mxu0 0
    %457 = vmatprep.subr.bf16.mxu0 0
    %458 = vmatpush1.bf16.msra.mxu0 %v103
    %459 = vmatprep.subr.bf16.mxu0 0
    %460 = vmatpush1.bf16.msra.mxu0 %v102
    %461 = vmatprep.subr.bf16.mxu0 0
    %462 = vmatpush2.bf16.msra.mxu0 0
    %463 = vmatprep.subr.bf16.mxu0 0
    %464 = vmatpush2.bf16.msra.mxu0 0
    %465 = vmatprep.subr.bf16.mxu0 0
    %466 = vmatpush2.bf16.msra.mxu0 0
    %467 = vmatprep.subr.bf16.mxu0 0
    %468 = vmatpush2.bf16.msra.mxu0 0
    %469 = vmatprep.subr.bf16.mxu0 0
    %470 = vmatpush2.bf16.msra.mxu0 0
    %471 = vmatprep.subr.bf16.mxu0 0
    %472 = vmatpush2.bf16.msra.mxu0 0
    %473 = vmatprep.subr.bf16.mxu0 0
    %474 = vmatpush2.bf16.msra.mxu0 0
    %475 = vmatprep.subr.bf16.mxu0 0
    %476 = vmatpush2.bf16.msra.mxu0 0
    %477 = vmatprep.mubr.bf16.mxu0 0
    %478 = vmatmul.mubr.bf16.gmra.mxu0 %v443
    %v479 = vpop.f32.mrf.mxu0
    %v480 = vadd.f32 0.0, %v479
    %v481 = vpop.f32.mrf.mxu0
    %v482 = vpop.f32.mrf.mxu0
    %v483 = vpop.f32.mrf.mxu0
    %484 = vdwg.mxu0
    %v485 = vadd.f32 %v437, %v480
    %v486 = vxor.u32 %v485, 2147483648
    %v487 = vmul.f32 %v486, 1.442695
    %v488 = vpow.pop %v487
    %v489 = vadd.f32 %v488, 1.0
    %v490 = vrcp.pop %v489
    %v491 = vmul.f32 1.0, %v490
    %v492 = vtanh.pop %v485
    %v493 = vmul.f32 %v491, %v352
    %495 = vrot.lane.b32.xlu0 %v492, 64
    %v496 = vpop.permute.xlu0 %495
    %v498 = vmul.f32 %v491, %v496
    %500 = vrot.lane.b32.xlu0 %v498, 32
    %v501 = vpop.permute.xlu0 %500
    %v503 = vadd.f32 %v493, %v501
    %v504 = vtanh.pop %v503
    %506 = vrot.lane.b32.xlu0 %v504, 64
    %v507 = vpop.permute.xlu0 %506
    %v509 = vmul.f32 %v491, %v507
    %511 = vrot.lane.b32.xlu0 %v509, 32
    %v512 = vpop.permute.xlu0 %511
    %515 = vrot.lane.b32.xlu0 %v435, 64
    %v516 = vpop.permute.xlu0 %515
    %v518 = vsel %vm106, %v512, %v516
    %v519 = vpack.c.bf16 %v518, %v518
    %v521 = vsel %vm213, %v519, 0
    %523 = vmatprep.subr.bf16.mxu0 0
    %524 = vmatpush1.bf16.msra.mxu0 0
    %525 = vmatprep.subr.bf16.mxu0 0
    %526 = vmatpush1.bf16.msra.mxu0 0
    %527 = vmatprep.subr.bf16.mxu0 0
    %528 = vmatpush1.bf16.msra.mxu0 0
    %529 = vmatprep.subr.bf16.mxu0 0
    %530 = vmatpush1.bf16.msra.mxu0 0
    %531 = vmatprep.subr.bf16.mxu0 0
    %532 = vmatpush1.bf16.msra.mxu0 %v208
    %533 = vmatprep.subr.bf16.mxu0 0
    %534 = vmatpush1.bf16.msra.mxu0 %v207
    %535 = vmatprep.subr.bf16.mxu0 0
    %536 = vmatpush1.bf16.msra.mxu0 %v206
    %537 = vmatprep.subr.bf16.mxu0 0
    %538 = vmatpush1.bf16.msra.mxu0 %v205
    %539 = vmatprep.subr.bf16.mxu0 0
    %540 = vmatpush2.bf16.msra.mxu0 0
    %541 = vmatprep.subr.bf16.mxu0 0
    %542 = vmatpush2.bf16.msra.mxu0 0
    %543 = vmatprep.subr.bf16.mxu0 0
    %544 = vmatpush2.bf16.msra.mxu0 0
    %545 = vmatprep.subr.bf16.mxu0 0
    %546 = vmatpush2.bf16.msra.mxu0 0
    %547 = vmatprep.subr.bf16.mxu0 0
    %548 = vmatpush2.bf16.msra.mxu0 0
    %549 = vmatprep.subr.bf16.mxu0 0
    %550 = vmatpush2.bf16.msra.mxu0 0
    %551 = vmatprep.subr.bf16.mxu0 0
    %552 = vmatpush2.bf16.msra.mxu0 0
    %553 = vmatprep.subr.bf16.mxu0 0
    %554 = vmatpush2.bf16.msra.mxu0 0
    %555 = vmatprep.mubr.bf16.mxu0 0
    %556 = vmatmul.mubr.bf16.gmra.mxu0 %v521
    %v557 = vpop.f32.mrf.mxu0
    %v558 = vadd.f32 %v86, %v557
    %v559 = vpop.f32.mrf.mxu0
    %v560 = vpop.f32.mrf.mxu0
    %v561 = vpop.f32.mrf.mxu0
    %562 = vdwg.mxu0
    %v563 = vxor.u32 %v558, 2147483648
    %v564 = vmul.f32 %v563, 1.442695
    %v565 = vpow.pop %v564
    %v566 = vadd.f32 %v565, 1.0
    %v567 = vrcp.pop %v566
    %v568 = vmul.f32 1.0, %v567
    %v569 = vtanh.pop %v558
    %v570 = vmul.f32 %v568, %v429
    %572 = vrot.lane.b32.xlu0 %v569, 64
    %v573 = vpop.permute.xlu0 %572
    %v575 = vmul.f32 %v568, %v573
    %577 = vrot.lane.b32.xlu0 %v575, 32
    %v578 = vpop.permute.xlu0 %577
    %v580 = vadd.f32 %v570, %v578
    %v581 = vtanh.pop %v580
    %583 = vrot.lane.b32.xlu0 %v581, 64
    %v584 = vpop.permute.xlu0 %583
    %v586 = vmul.f32 %v568, %v584
    %s587 = scalar_lea.vmem [#allocation6], 6
    %v588 = vld [vmem:[%s587] sm:$0x3]
    %v589 = vpack.c.bf16 %v509, %v509
    %591 = vrot.lane.b32.xlu0 %v589, 32
    %v592 = vpop.permute.xlu0 %591
    %v594 = vsel %vm106, %v592, 0
    %596 = vmatprep.subr.bf16.mxu0 0
    %597 = vmatpush1.bf16.msra.mxu0 0
    %598 = vmatprep.subr.bf16.mxu0 0
    %599 = vmatpush1.bf16.msra.mxu0 0
    %600 = vmatprep.subr.bf16.mxu0 0
    %601 = vmatpush1.bf16.msra.mxu0 0
    %602 = vmatprep.subr.bf16.mxu0 0
    %603 = vmatpush1.bf16.msra.mxu0 0
    %604 = vmatprep.subr.bf16.mxu0 0
    %605 = vmatpush1.bf16.msra.mxu0 0
    %606 = vmatprep.subr.bf16.mxu0 0
    %607 = vmatpush1.bf16.msra.mxu0 0
    %608 = vmatprep.subr.bf16.mxu0 0
    %609 = vmatpush1.bf16.msra.mxu0 %v103
    %610 = vmatprep.subr.bf16.mxu0 0
    %611 = vmatpush1.bf16.msra.mxu0 %v102
    %612 = vmatprep.subr.bf16.mxu0 0
    %613 = vmatpush2.bf16.msra.mxu0 0
    %614 = vmatprep.subr.bf16.mxu0 0
    %615 = vmatpush2.bf16.msra.mxu0 0
    %616 = vmatprep.subr.bf16.mxu0 0
    %617 = vmatpush2.bf16.msra.mxu0 0
    %618 = vmatprep.subr.bf16.mxu0 0
    %619 = vmatpush2.bf16.msra.mxu0 0
    %620 = vmatprep.subr.bf16.mxu0 0
    %621 = vmatpush2.bf16.msra.mxu0 0
    %622 = vmatprep.subr.bf16.mxu0 0
    %623 = vmatpush2.bf16.msra.mxu0 0
    %624 = vmatprep.subr.bf16.mxu0 0
    %625 = vmatpush2.bf16.msra.mxu0 0
    %626 = vmatprep.subr.bf16.mxu0 0
    %627 = vmatpush2.bf16.msra.mxu0 0
    %628 = vmatprep.mubr.bf16.mxu0 0
    %629 = vmatmul.mubr.bf16.gmra.mxu0 %v594
    %v630 = vpop.f32.mrf.mxu0
    %v631 = vadd.f32 0.0, %v630
    %v632 = vpop.f32.mrf.mxu0
    %v633 = vpop.f32.mrf.mxu0
    %v634 = vpop.f32.mrf.mxu0
    %635 = vdwg.mxu0
    %v636 = vadd.f32 %v588, %v631
    %v637 = vxor.u32 %v636, 2147483648
    %v638 = vmul.f32 %v637, 1.442695
    %v639 = vpow.pop %v638
    %v640 = vadd.f32 %v639, 1.0
    %v641 = vrcp.pop %v640
    %v642 = vmul.f32 1.0, %v641
    %v643 = vtanh.pop %v636
    %v644 = vmul.f32 %v642, %v503
    %646 = vrot.lane.b32.xlu0 %v643, 64
    %v647 = vpop.permute.xlu0 %646
    %v649 = vmul.f32 %v642, %v647
    %651 = vrot.lane.b32.xlu0 %v649, 32
    %v652 = vpop.permute.xlu0 %651
    %v654 = vadd.f32 %v644, %v652
    %v655 = vtanh.pop %v654
    %657 = vrot.lane.b32.xlu0 %v655, 64
    %v658 = vpop.permute.xlu0 %657
    %v660 = vmul.f32 %v642, %v658
    %662 = vrot.lane.b32.xlu0 %v660, 32
    %v663 = vpop.permute.xlu0 %662
    %666 = vrot.lane.b32.xlu0 %v586, 64
    %v667 = vpop.permute.xlu0 %666
    %v669 = vsel %vm106, %v663, %v667
    %v670 = vpack.c.bf16 %v669, %v669
    %v672 = vsel %vm213, %v670, 0
    %674 = vmatprep.subr.bf16.mxu0 0
    %675 = vmatpush1.bf16.msra.mxu0 0
    %676 = vmatprep.subr.bf16.mxu0 0
    %677 = vmatpush1.bf16.msra.mxu0 0
    %678 = vmatprep.subr.bf16.mxu0 0
    %679 = vmatpush1.bf16.msra.mxu0 0
    %680 = vmatprep.subr.bf16.mxu0 0
    %681 = vmatpush1.bf16.msra.mxu0 0
    %682 = vmatprep.subr.bf16.mxu0 0
    %683 = vmatpush1.bf16.msra.mxu0 %v208
    %684 = vmatprep.subr.bf16.mxu0 0
    %685 = vmatpush1.bf16.msra.mxu0 %v207
    %686 = vmatprep.subr.bf16.mxu0 0
    %687 = vmatpush1.bf16.msra.mxu0 %v206
    %688 = vmatprep.subr.bf16.mxu0 0
    %689 = vmatpush1.bf16.msra.mxu0 %v205
    %690 = vmatprep.subr.bf16.mxu0 0
    %691 = vmatpush2.bf16.msra.mxu0 0
    %692 = vmatprep.subr.bf16.mxu0 0
    %693 = vmatpush2.bf16.msra.mxu0 0
    %694 = vmatprep.subr.bf16.mxu0 0
    %695 = vmatpush2.bf16.msra.mxu0 0
    %696 = vmatprep.subr.bf16.mxu0 0
    %697 = vmatpush2.bf16.msra.mxu0 0
    %698 = vmatprep.subr.bf16.mxu0 0
    %699 = vmatpush2.bf16.msra.mxu0 0
    %700 = vmatprep.subr.bf16.mxu0 0
    %701 = vmatpush2.bf16.msra.mxu0 0
    %702 = vmatprep.subr.bf16.mxu0 0
    %703 = vmatpush2.bf16.msra.mxu0 0
    %704 = vmatprep.subr.bf16.mxu0 0
    %705 = vmatpush2.bf16.msra.mxu0 0
    %706 = vmatprep.mubr.bf16.mxu0 0
    %707 = vmatmul.mubr.bf16.gmra.mxu0 %v672
    %v708 = vpop.f32.mrf.mxu0
    %v709 = vadd.f32 %v86, %v708
    %v710 = vpop.f32.mrf.mxu0
    %v711 = vpop.f32.mrf.mxu0
    %v712 = vpop.f32.mrf.mxu0
    %713 = vdwg.mxu0
    %v714 = vxor.u32 %v709, 2147483648
    %v715 = vmul.f32 %v714, 1.442695
    %v716 = vpow.pop %v715
    %v717 = vadd.f32 %v716, 1.0
    %v718 = vrcp.pop %v717
    %v719 = vmul.f32 1.0, %v718
    %v720 = vtanh.pop %v709
    %v721 = vmul.f32 %v719, %v580
    %723 = vrot.lane.b32.xlu0 %v720, 64
    %v724 = vpop.permute.xlu0 %723
    %v726 = vmul.f32 %v719, %v724
    %728 = vrot.lane.b32.xlu0 %v726, 32
    %v729 = vpop.permute.xlu0 %728
    %v731 = vadd.f32 %v721, %v729
    %v732 = vtanh.pop %v731
    %734 = vrot.lane.b32.xlu0 %v732, 64
    %v735 = vpop.permute.xlu0 %734
    %v737 = vmul.f32 %v719, %v735
    %s738 = scalar_lea.vmem [#allocation6], 8
    %v739 = vld [vmem:[%s738] sm:$0x3]
    %v740 = vpack.c.bf16 %v660, %v660
    %742 = vrot.lane.b32.xlu0 %v740, 32
    %v743 = vpop.permute.xlu0 %742
    %v745 = vsel %vm106, %v743, 0
    %747 = vmatprep.subr.bf16.mxu0 0
    %748 = vmatpush1.bf16.msra.mxu0 0
    %749 = vmatprep.subr.bf16.mxu0 0
    %750 = vmatpush1.bf16.msra.mxu0 0
    %751 = vmatprep.subr.bf16.mxu0 0
    %752 = vmatpush1.bf16.msra.mxu0 0
    %753 = vmatprep.subr.bf16.mxu0 0
    %754 = vmatpush1.bf16.msra.mxu0 0
    %755 = vmatprep.subr.bf16.mxu0 0
    %756 = vmatpush1.bf16.msra.mxu0 0
    %757 = vmatprep.subr.bf16.mxu0 0
    %758 = vmatpush1.bf16.msra.mxu0 0
    %759 = vmatprep.subr.bf16.mxu0 0
    %760 = vmatpush1.bf16.msra.mxu0 %v103
    %761 = vmatprep.subr.bf16.mxu0 0
    %762 = vmatpush1.bf16.msra.mxu0 %v102
    %763 = vmatprep.subr.bf16.mxu0 0
    %764 = vmatpush2.bf16.msra.mxu0 0
    %765 = vmatprep.subr.bf16.mxu0 0
    %766 = vmatpush2.bf16.msra.mxu0 0
    %767 = vmatprep.subr.bf16.mxu0 0
    %768 = vmatpush2.bf16.msra.mxu0 0
    %769 = vmatprep.subr.bf16.mxu0 0
    %770 = vmatpush2.bf16.msra.mxu0 0
    %771 = vmatprep.subr.bf16.mxu0 0
    %772 = vmatpush2.bf16.msra.mxu0 0
    %773 = vmatprep.subr.bf16.mxu0 0
    %774 = vmatpush2.bf16.msra.mxu0 0
    %775 = vmatprep.subr.bf16.mxu0 0
    %776 = vmatpush2.bf16.msra.mxu0 0
    %777 = vmatprep.subr.bf16.mxu0 0
    %778 = vmatpush2.bf16.msra.mxu0 0
    %779 = vmatprep.mubr.bf16.mxu0 0
    %780 = vmatmul.mubr.bf16.gmra.mxu0 %v745
    %v781 = vpop.f32.mrf.mxu0
    %v782 = vadd.f32 0.0, %v781
    %v783 = vpop.f32.mrf.mxu0
    %v784 = vpop.f32.mrf.mxu0
    %v785 = vpop.f32.mrf.mxu0
    %786 = vdwg.mxu0
    %v787 = vadd.f32 %v739, %v782
    %v788 = vxor.u32 %v787, 2147483648
    %v789 = vmul.f32 %v788, 1.442695
    %v790 = vpow.pop %v789
    %v791 = vadd.f32 %v790, 1.0
    %v792 = vrcp.pop %v791
    %v793 = vmul.f32 1.0, %v792
    %v794 = vtanh.pop %v787
    %v795 = vmul.f32 %v793, %v654
    %797 = vrot.lane.b32.xlu0 %v794, 64
    %v798 = vpop.permute.xlu0 %797
    %v800 = vmul.f32 %v793, %v798
    %802 = vrot.lane.b32.xlu0 %v800, 32
    %v803 = vpop.permute.xlu0 %802
    %v805 = vadd.f32 %v795, %v803
    %v806 = vtanh.pop %v805
    %808 = vrot.lane.b32.xlu0 %v806, 64
    %v809 = vpop.permute.xlu0 %808
    %v811 = vmul.f32 %v793, %v809
    %813 = vrot.lane.b32.xlu0 %v811, 32
    %v814 = vpop.permute.xlu0 %813
    %817 = vrot.lane.b32.xlu0 %v737, 64
    %v818 = vpop.permute.xlu0 %817
    %v820 = vsel %vm106, %v814, %v818
    %v821 = vpack.c.bf16 %v820, %v820
    %v823 = vsel %vm213, %v821, 0
    %825 = vmatprep.subr.bf16.mxu0 0
    %826 = vmatpush1.bf16.msra.mxu0 0
    %827 = vmatprep.subr.bf16.mxu0 0
    %828 = vmatpush1.bf16.msra.mxu0 0
    %829 = vmatprep.subr.bf16.mxu0 0
    %830 = vmatpush1.bf16.msra.mxu0 0
    %831 = vmatprep.subr.bf16.mxu0 0
    %832 = vmatpush1.bf16.msra.mxu0 0
    %833 = vmatprep.subr.bf16.mxu0 0
    %834 = vmatpush1.bf16.msra.mxu0 %v208
    %835 = vmatprep.subr.bf16.mxu0 0
    %836 = vmatpush1.bf16.msra.mxu0 %v207
    %837 = vmatprep.subr.bf16.mxu0 0
    %838 = vmatpush1.bf16.msra.mxu0 %v206
    %839 = vmatprep.subr.bf16.mxu0 0
    %840 = vmatpush1.bf16.msra.mxu0 %v205
    %841 = vmatprep.subr.bf16.mxu0 0
    %842 = vmatpush2.bf16.msra.mxu0 0
    %843 = vmatprep.subr.bf16.mxu0 0
    %844 = vmatpush2.bf16.msra.mxu0 0
    %845 = vmatprep.subr.bf16.mxu0 0
    %846 = vmatpush2.bf16.msra.mxu0 0
    %847 = vmatprep.subr.bf16.mxu0 0
    %848 = vmatpush2.bf16.msra.mxu0 0
    %849 = vmatprep.subr.bf16.mxu0 0
    %850 = vmatpush2.bf16.msra.mxu0 0
    %851 = vmatprep.subr.bf16.mxu0 0
    %852 = vmatpush2.bf16.msra.mxu0 0
    %853 = vmatprep.subr.bf16.mxu0 0
    %854 = vmatpush2.bf16.msra.mxu0 0
    %855 = vmatprep.subr.bf16.mxu0 0
    %856 = vmatpush2.bf16.msra.mxu0 0
    %857 = vmatprep.mubr.bf16.mxu0 0
    %858 = vmatmul.mubr.bf16.gmra.mxu0 %v823
    %v859 = vpop.f32.mrf.mxu0
    %v860 = vadd.f32 %v86, %v859
    %v861 = vpop.f32.mrf.mxu0
    %v862 = vpop.f32.mrf.mxu0
    %v863 = vpop.f32.mrf.mxu0
    %864 = vdwg.mxu0
    %v865 = vxor.u32 %v860, 2147483648
    %v866 = vmul.f32 %v865, 1.442695
    %v867 = vpow.pop %v866
    %v868 = vadd.f32 %v867, 1.0
    %v869 = vrcp.pop %v868
    %v870 = vmul.f32 1.0, %v869
    %v871 = vtanh.pop %v860
    %v872 = vmul.f32 %v870, %v731
    %874 = vrot.lane.b32.xlu0 %v871, 64
    %v875 = vpop.permute.xlu0 %874
    %v877 = vmul.f32 %v870, %v875
    %879 = vrot.lane.b32.xlu0 %v877, 32
    %v880 = vpop.permute.xlu0 %879
    %v882 = vadd.f32 %v872, %v880
    %v883 = vtanh.pop %v882
    %885 = vrot.lane.b32.xlu0 %v883, 64
    %v886 = vpop.permute.xlu0 %885
    %v888 = vmul.f32 %v870, %v886
    %s889 = scalar_lea.vmem [#allocation6], 10
    %v890 = vld [vmem:[%s889] sm:$0x3]
    %v891 = vpack.c.bf16 %v811, %v811
    %893 = vrot.lane.b32.xlu0 %v891, 32
    %v894 = vpop.permute.xlu0 %893
    %v896 = vsel %vm106, %v894, 0
    %898 = vmatprep.subr.bf16.mxu0 0
    %899 = vmatpush1.bf16.msra.mxu0 0
    %900 = vmatprep.subr.bf16.mxu0 0
    %901 = vmatpush1.bf16.msra.mxu0 0
    %902 = vmatprep.subr.bf16.mxu0 0
    %903 = vmatpush1.bf16.msra.mxu0 0
    %904 = vmatprep.subr.bf16.mxu0 0
    %905 = vmatpush1.bf16.msra.mxu0 0
    %906 = vmatprep.subr.bf16.mxu0 0
    %907 = vmatpush1.bf16.msra.mxu0 0
    %908 = vmatprep.subr.bf16.mxu0 0
    %909 = vmatpush1.bf16.msra.mxu0 0
    %910 = vmatprep.subr.bf16.mxu0 0
    %911 = vmatpush1.bf16.msra.mxu0 %v103
    %912 = vmatprep.subr.bf16.mxu0 0
    %913 = vmatpush1.bf16.msra.mxu0 %v102
    %914 = vmatprep.subr.bf16.mxu0 0
    %915 = vmatpush2.bf16.msra.mxu0 0
    %916 = vmatprep.subr.bf16.mxu0 0
    %917 = vmatpush2.bf16.msra.mxu0 0
    %918 = vmatprep.subr.bf16.mxu0 0
    %919 = vmatpush2.bf16.msra.mxu0 0
    %920 = vmatprep.subr.bf16.mxu0 0
    %921 = vmatpush2.bf16.msra.mxu0 0
    %922 = vmatprep.subr.bf16.mxu0 0
    %923 = vmatpush2.bf16.msra.mxu0 0
    %924 = vmatprep.subr.bf16.mxu0 0
    %925 = vmatpush2.bf16.msra.mxu0 0
    %926 = vmatprep.subr.bf16.mxu0 0
    %927 = vmatpush2.bf16.msra.mxu0 0
    %928 = vmatprep.subr.bf16.mxu0 0
    %929 = vmatpush2.bf16.msra.mxu0 0
    %930 = vmatprep.mubr.bf16.mxu0 0
    %931 = vmatmul.mubr.bf16.gmra.mxu0 %v896
    %v932 = vpop.f32.mrf.mxu0
    %v933 = vadd.f32 0.0, %v932
    %v934 = vpop.f32.mrf.mxu0
    %v935 = vpop.f32.mrf.mxu0
    %v936 = vpop.f32.mrf.mxu0
    %937 = vdwg.mxu0
    %v938 = vadd.f32 %v890, %v933
    %v939 = vxor.u32 %v938, 2147483648
    %v940 = vmul.f32 %v939, 1.442695
    %v941 = vpow.pop %v940
    %v942 = vadd.f32 %v941, 1.0
    %v943 = vrcp.pop %v942
    %v944 = vmul.f32 1.0, %v943
    %v945 = vtanh.pop %v938
    %v946 = vmul.f32 %v944, %v805
    %948 = vrot.lane.b32.xlu0 %v945, 64
    %v949 = vpop.permute.xlu0 %948
    %v951 = vmul.f32 %v944, %v949
    %953 = vrot.lane.b32.xlu0 %v951, 32
    %v954 = vpop.permute.xlu0 %953
    %v956 = vadd.f32 %v946, %v954
    %v957 = vtanh.pop %v956
    %959 = vrot.lane.b32.xlu0 %v957, 64
    %v960 = vpop.permute.xlu0 %959
    %v962 = vmul.f32 %v944, %v960
    %964 = vrot.lane.b32.xlu0 %v962, 32
    %v965 = vpop.permute.xlu0 %964
    %968 = vrot.lane.b32.xlu0 %v888, 64
    %v969 = vpop.permute.xlu0 %968
    %v971 = vsel %vm106, %v965, %v969
    %v972 = vpack.c.bf16 %v971, %v971
    %v974 = vsel %vm213, %v972, 0
    %976 = vmatprep.subr.bf16.mxu0 0
    %977 = vmatpush1.bf16.msra.mxu0 0
    %978 = vmatprep.subr.bf16.mxu0 0
    %979 = vmatpush1.bf16.msra.mxu0 0
    %980 = vmatprep.subr.bf16.mxu0 0
    %981 = vmatpush1.bf16.msra.mxu0 0
    %982 = vmatprep.subr.bf16.mxu0 0
    %983 = vmatpush1.bf16.msra.mxu0 0
    %984 = vmatprep.subr.bf16.mxu0 0
    %985 = vmatpush1.bf16.msra.mxu0 %v208
    %986 = vmatprep.subr.bf16.mxu0 0
    %987 = vmatpush1.bf16.msra.mxu0 %v207
    %988 = vmatprep.subr.bf16.mxu0 0
    %989 = vmatpush1.bf16.msra.mxu0 %v206
    %990 = vmatprep.subr.bf16.mxu0 0
    %991 = vmatpush1.bf16.msra.mxu0 %v205
    %992 = vmatprep.subr.bf16.mxu0 0
    %993 = vmatpush2.bf16.msra.mxu0 0
    %994 = vmatprep.subr.bf16.mxu0 0
    %995 = vmatpush2.bf16.msra.mxu0 0
    %996 = vmatprep.subr.bf16.mxu0 0
    %997 = vmatpush2.bf16.msra.mxu0 0
    %998 = vmatprep.subr.bf16.mxu0 0
    %999 = vmatpush2.bf16.msra.mxu0 0
    %1000 = vmatprep.subr.bf16.mxu0 0
    %1001 = vmatpush2.bf16.msra.mxu0 0
    %1002 = vmatprep.subr.bf16.mxu0 0
    %1003 = vmatpush2.bf16.msra.mxu0 0
    %1004 = vmatprep.subr.bf16.mxu0 0
    %1005 = vmatpush2.bf16.msra.mxu0 0
    %1006 = vmatprep.subr.bf16.mxu0 0
    %1007 = vmatpush2.bf16.msra.mxu0 0
    %1008 = vmatprep.mubr.bf16.mxu0 0
    %1009 = vmatmul.mubr.bf16.gmra.mxu0 %v974
    %v1010 = vpop.f32.mrf.mxu0
    %v1011 = vadd.f32 %v86, %v1010
    %v1012 = vpop.f32.mrf.mxu0
    %v1013 = vpop.f32.mrf.mxu0
    %v1014 = vpop.f32.mrf.mxu0
    %1015 = vdwg.mxu0
    %v1016 = vxor.u32 %v1011, 2147483648
    %v1017 = vmul.f32 %v1016, 1.442695
    %v1018 = vpow.pop %v1017
    %v1019 = vadd.f32 %v1018, 1.0
    %v1020 = vrcp.pop %v1019
    %v1021 = vmul.f32 1.0, %v1020
    %v1022 = vtanh.pop %v1011
    %v1023 = vmul.f32 %v1021, %v882
    %1025 = vrot.lane.b32.xlu0 %v1022, 64
    %v1026 = vpop.permute.xlu0 %1025
    %v1028 = vmul.f32 %v1021, %v1026
    %1030 = vrot.lane.b32.xlu0 %v1028, 32
    %v1031 = vpop.permute.xlu0 %1030
    %v1033 = vadd.f32 %v1023, %v1031
    %v1034 = vtanh.pop %v1033
    %1036 = vrot.lane.b32.xlu0 %v1034, 64
    %v1037 = vpop.permute.xlu0 %1036
    %v1039 = vmul.f32 %v1021, %v1037
    %s1040 = scalar_lea.vmem [#allocation6], 12
    %v1041 = vld [vmem:[%s1040] sm:$0x3]
    %v1042 = vpack.c.bf16 %v962, %v962
    %1044 = vrot.lane.b32.xlu0 %v1042, 32
    %v1045 = vpop.permute.xlu0 %1044
    %v1047 = vsel %vm106, %v1045, 0
    %1049 = vmatprep.subr.bf16.mxu0 0
    %1050 = vmatpush1.bf16.msra.mxu0 0
    %1051 = vmatprep.subr.bf16.mxu0 0
    %1052 = vmatpush1.bf16.msra.mxu0 0
    %1053 = vmatprep.subr.bf16.mxu0 0
    %1054 = vmatpush1.bf16.msra.mxu0 0
    %1055 = vmatprep.subr.bf16.mxu0 0
    %1056 = vmatpush1.bf16.msra.mxu0 0
    %1057 = vmatprep.subr.bf16.mxu0 0
    %1058 = vmatpush1.bf16.msra.mxu0 0
    %1059 = vmatprep.subr.bf16.mxu0 0
    %1060 = vmatpush1.bf16.msra.mxu0 0
    %1061 = vmatprep.subr.bf16.mxu0 0
    %1062 = vmatpush1.bf16.msra.mxu0 %v103
    %1063 = vmatprep.subr.bf16.mxu0 0
    %1064 = vmatpush1.bf16.msra.mxu0 %v102
    %1065 = vmatprep.subr.bf16.mxu0 0
    %1066 = vmatpush2.bf16.msra.mxu0 0
    %1067 = vmatprep.subr.bf16.mxu0 0
    %1068 = vmatpush2.bf16.msra.mxu0 0
    %1069 = vmatprep.subr.bf16.mxu0 0
    %1070 = vmatpush2.bf16.msra.mxu0 0
    %1071 = vmatprep.subr.bf16.mxu0 0
    %1072 = vmatpush2.bf16.msra.mxu0 0
    %1073 = vmatprep.subr.bf16.mxu0 0
    %1074 = vmatpush2.bf16.msra.mxu0 0
    %1075 = vmatprep.subr.bf16.mxu0 0
    %1076 = vmatpush2.bf16.msra.mxu0 0
    %1077 = vmatprep.subr.bf16.mxu0 0
    %1078 = vmatpush2.bf16.msra.mxu0 0
    %1079 = vmatprep.subr.bf16.mxu0 0
    %1080 = vmatpush2.bf16.msra.mxu0 0
    %1081 = vmatprep.mubr.bf16.mxu0 0
    %1082 = vmatmul.mubr.bf16.gmra.mxu0 %v1047
    %v1083 = vpop.f32.mrf.mxu0
    %v1084 = vadd.f32 0.0, %v1083
    %v1085 = vpop.f32.mrf.mxu0
    %v1086 = vpop.f32.mrf.mxu0
    %v1087 = vpop.f32.mrf.mxu0
    %1088 = vdwg.mxu0
    %v1089 = vadd.f32 %v1041, %v1084
    %v1090 = vxor.u32 %v1089, 2147483648
    %v1091 = vmul.f32 %v1090, 1.442695
    %v1092 = vpow.pop %v1091
    %v1093 = vadd.f32 %v1092, 1.0
    %v1094 = vrcp.pop %v1093
    %v1095 = vmul.f32 1.0, %v1094
    %v1096 = vtanh.pop %v1089
    %v1097 = vmul.f32 %v1095, %v956
    %1099 = vrot.lane.b32.xlu0 %v1096, 64
    %v1100 = vpop.permute.xlu0 %1099
    %v1102 = vmul.f32 %v1095, %v1100
    %1104 = vrot.lane.b32.xlu0 %v1102, 32
    %v1105 = vpop.permute.xlu0 %1104
    %v1107 = vadd.f32 %v1097, %v1105
    %v1108 = vtanh.pop %v1107
    %1110 = vrot.lane.b32.xlu0 %v1108, 64
    %v1111 = vpop.permute.xlu0 %1110
    %v1113 = vmul.f32 %v1095, %v1111
    %1115 = vrot.lane.b32.xlu0 %v1113, 32
    %v1116 = vpop.permute.xlu0 %1115
    %1119 = vrot.lane.b32.xlu0 %v1039, 64
    %v1120 = vpop.permute.xlu0 %1119
    %v1122 = vsel %vm106, %v1116, %v1120
    %v1123 = vpack.c.bf16 %v1122, %v1122
    %v1125 = vsel %vm213, %v1123, 0
    %1127 = vmatprep.subr.bf16.mxu0 0
    %1128 = vmatpush1.bf16.msra.mxu0 0
    %1129 = vmatprep.subr.bf16.mxu0 0
    %1130 = vmatpush1.bf16.msra.mxu0 0
    %1131 = vmatprep.subr.bf16.mxu0 0
    %1132 = vmatpush1.bf16.msra.mxu0 0
    %1133 = vmatprep.subr.bf16.mxu0 0
    %1134 = vmatpush1.bf16.msra.mxu0 0
    %1135 = vmatprep.subr.bf16.mxu0 0
    %1136 = vmatpush1.bf16.msra.mxu0 %v208
    %1137 = vmatprep.subr.bf16.mxu0 0
    %1138 = vmatpush1.bf16.msra.mxu0 %v207
    %1139 = vmatprep.subr.bf16.mxu0 0
    %1140 = vmatpush1.bf16.msra.mxu0 %v206
    %1141 = vmatprep.subr.bf16.mxu0 0
    %1142 = vmatpush1.bf16.msra.mxu0 %v205
    %1143 = vmatprep.subr.bf16.mxu0 0
    %1144 = vmatpush2.bf16.msra.mxu0 0
    %1145 = vmatprep.subr.bf16.mxu0 0
    %1146 = vmatpush2.bf16.msra.mxu0 0
    %1147 = vmatprep.subr.bf16.mxu0 0
    %1148 = vmatpush2.bf16.msra.mxu0 0
    %1149 = vmatprep.subr.bf16.mxu0 0
    %1150 = vmatpush2.bf16.msra.mxu0 0
    %1151 = vmatprep.subr.bf16.mxu0 0
    %1152 = vmatpush2.bf16.msra.mxu0 0
    %1153 = vmatprep.subr.bf16.mxu0 0
    %1154 = vmatpush2.bf16.msra.mxu0 0
    %1155 = vmatprep.subr.bf16.mxu0 0
    %1156 = vmatpush2.bf16.msra.mxu0 0
    %1157 = vmatprep.subr.bf16.mxu0 0
    %1158 = vmatpush2.bf16.msra.mxu0 0
    %1159 = vmatprep.mubr.bf16.mxu0 0
    %1160 = vmatmul.mubr.bf16.gmra.mxu0 %v1125
    %v1161 = vpop.f32.mrf.mxu0
    %v1162 = vadd.f32 %v86, %v1161
    %v1163 = vpop.f32.mrf.mxu0
    %v1164 = vpop.f32.mrf.mxu0
    %v1165 = vpop.f32.mrf.mxu0
    %1166 = vdwg.mxu0
    %v1167 = vxor.u32 %v1162, 2147483648
    %v1168 = vmul.f32 %v1167, 1.442695
    %v1169 = vpow.pop %v1168
    %v1170 = vadd.f32 %v1169, 1.0
    %v1171 = vrcp.pop %v1170
    %v1172 = vmul.f32 1.0, %v1171
    %v1173 = vtanh.pop %v1162
    %v1174 = vmul.f32 %v1172, %v1033
    %1176 = vrot.lane.b32.xlu0 %v1173, 64
    %v1177 = vpop.permute.xlu0 %1176
    %v1179 = vmul.f32 %v1172, %v1177
    %1181 = vrot.lane.b32.xlu0 %v1179, 32
    %v1182 = vpop.permute.xlu0 %1181
    %v1184 = vadd.f32 %v1174, %v1182
    %v1185 = vtanh.pop %v1184
    %1187 = vrot.lane.b32.xlu0 %v1185, 64
    %v1188 = vpop.permute.xlu0 %1187
    %v1190 = vmul.f32 %v1172, %v1188
    %s1191 = scalar_lea.vmem [#allocation6], 14
    %v1192 = vld [vmem:[%s1191] sm:$0x3]
    %v1193 = vpack.c.bf16 %v1113, %v1113
    %1195 = vrot.lane.b32.xlu0 %v1193, 32
    %v1196 = vpop.permute.xlu0 %1195
    %v1198 = vsel %vm106, %v1196, 0
    %1200 = vmatprep.subr.bf16.mxu0 0
    %1201 = vmatpush1.bf16.msra.mxu0 0
    %1202 = vmatprep.subr.bf16.mxu0 0
    %1203 = vmatpush1.bf16.msra.mxu0 0
    %1204 = vmatprep.subr.bf16.mxu0 0
    %1205 = vmatpush1.bf16.msra.mxu0 0
    %1206 = vmatprep.subr.bf16.mxu0 0
    %1207 = vmatpush1.bf16.msra.mxu0 0
    %1208 = vmatprep.subr.bf16.mxu0 0
    %1209 = vmatpush1.bf16.msra.mxu0 0
    %1210 = vmatprep.subr.bf16.mxu0 0
    %1211 = vmatpush1.bf16.msra.mxu0 0
    %1212 = vmatprep.subr.bf16.mxu0 0
    %1213 = vmatpush1.bf16.msra.mxu0 %v103
    %1214 = vmatprep.subr.bf16.mxu0 0
    %1215 = vmatpush1.bf16.msra.mxu0 %v102
    %1216 = vmatprep.subr.bf16.mxu0 0
    %1217 = vmatpush2.bf16.msra.mxu0 0
    %1218 = vmatprep.subr.bf16.mxu0 0
    %1219 = vmatpush2.bf16.msra.mxu0 0
    %1220 = vmatprep.subr.bf16.mxu0 0
    %1221 = vmatpush2.bf16.msra.mxu0 0
    %1222 = vmatprep.subr.bf16.mxu0 0
    %1223 = vmatpush2.bf16.msra.mxu0 0
    %1224 = vmatprep.subr.bf16.mxu0 0
    %1225 = vmatpush2.bf16.msra.mxu0 0
    %1226 = vmatprep.subr.bf16.mxu0 0
    %1227 = vmatpush2.bf16.msra.mxu0 0
    %1228 = vmatprep.subr.bf16.mxu0 0
    %1229 = vmatpush2.bf16.msra.mxu0 0
    %1230 = vmatprep.subr.bf16.mxu0 0
    %1231 = vmatpush2.bf16.msra.mxu0 0
    %1232 = vmatprep.mubr.bf16.mxu0 0
    %1233 = vmatmul.mubr.bf16.gmra.mxu0 %v1198
    %v1234 = vpop.f32.mrf.mxu0
    %v1235 = vadd.f32 0.0, %v1234
    %v1236 = vpop.f32.mrf.mxu0
    %v1237 = vpop.f32.mrf.mxu0
    %v1238 = vpop.f32.mrf.mxu0
    %1239 = vdwg.mxu0
    %v1240 = vadd.f32 %v1192, %v1235
    %v1241 = vxor.u32 %v1240, 2147483648
    %v1242 = vmul.f32 %v1241, 1.442695
    %v1243 = vpow.pop %v1242
    %v1244 = vadd.f32 %v1243, 1.0
    %v1245 = vrcp.pop %v1244
    %v1246 = vmul.f32 1.0, %v1245
    %v1247 = vtanh.pop %v1240
    %v1248 = vmul.f32 %v1246, %v1107
    %1250 = vrot.lane.b32.xlu0 %v1247, 64
    %v1251 = vpop.permute.xlu0 %1250
    %v1253 = vmul.f32 %v1246, %v1251
    %1255 = vrot.lane.b32.xlu0 %v1253, 32
    %v1256 = vpop.permute.xlu0 %1255
    %v1258 = vadd.f32 %v1248, %v1256
    %v1259 = vtanh.pop %v1258
    %1261 = vrot.lane.b32.xlu0 %v1259, 64
    %v1262 = vpop.permute.xlu0 %1261
    %v1264 = vmul.f32 %v1246, %v1262
    %1266 = vrot.lane.b32.xlu0 %v1264, 32
    %v1267 = vpop.permute.xlu0 %1266
    %1270 = vrot.lane.b32.xlu0 %v1190, 64
    %v1271 = vpop.permute.xlu0 %1270
    %v1273 = vsel %vm106, %v1267, %v1271
    %v1274 = vpack.c.bf16 %v1273, %v1273
    %v1276 = vsel %vm213, %v1274, 0
    %1278 = vmatprep.subr.bf16.mxu0 0
    %1279 = vmatpush1.bf16.msra.mxu0 0
    %1280 = vmatprep.subr.bf16.mxu0 0
    %1281 = vmatpush1.bf16.msra.mxu0 0
    %1282 = vmatprep.subr.bf16.mxu0 0
    %1283 = vmatpush1.bf16.msra.mxu0 0
    %1284 = vmatprep.subr.bf16.mxu0 0
    %1285 = vmatpush1.bf16.msra.mxu0 0
    %1286 = vmatprep.subr.bf16.mxu0 0
    %1287 = vmatpush1.bf16.msra.mxu0 %v208
    %1288 = vmatprep.subr.bf16.mxu0 0
    %1289 = vmatpush1.bf16.msra.mxu0 %v207
    %1290 = vmatprep.subr.bf16.mxu0 0
    %1291 = vmatpush1.bf16.msra.mxu0 %v206
    %1292 = vmatprep.subr.bf16.mxu0 0
    %1293 = vmatpush1.bf16.msra.mxu0 %v205
    %1294 = vmatprep.subr.bf16.mxu0 0
    %1295 = vmatpush2.bf16.msra.mxu0 0
    %1296 = vmatprep.subr.bf16.mxu0 0
    %1297 = vmatpush2.bf16.msra.mxu0 0
    %1298 = vmatprep.subr.bf16.mxu0 0
    %1299 = vmatpush2.bf16.msra.mxu0 0
    %1300 = vmatprep.subr.bf16.mxu0 0
    %1301 = vmatpush2.bf16.msra.mxu0 0
    %1302 = vmatprep.subr.bf16.mxu0 0
    %1303 = vmatpush2.bf16.msra.mxu0 0
    %1304 = vmatprep.subr.bf16.mxu0 0
    %1305 = vmatpush2.bf16.msra.mxu0 0
    %1306 = vmatprep.subr.bf16.mxu0 0
    %1307 = vmatpush2.bf16.msra.mxu0 0
    %1308 = vmatprep.subr.bf16.mxu0 0
    %1309 = vmatpush2.bf16.msra.mxu0 0
    %1310 = vmatprep.mubr.bf16.mxu0 0
    %1311 = vmatmul.mubr.bf16.gmra.mxu0 %v1276
    %v1312 = vpop.f32.mrf.mxu0
    %v1313 = vadd.f32 %v86, %v1312
    %v1314 = vpop.f32.mrf.mxu0
    %v1315 = vpop.f32.mrf.mxu0
    %v1316 = vpop.f32.mrf.mxu0
    %1317 = vdwg.mxu0
    %v1318 = vxor.u32 %v1313, 2147483648
    %v1319 = vmul.f32 %v1318, 1.442695
    %v1320 = vpow.pop %v1319
    %v1321 = vadd.f32 %v1320, 1.0
    %v1322 = vrcp.pop %v1321
    %v1323 = vmul.f32 1.0, %v1322
    %v1324 = vtanh.pop %v1313
    %v1325 = vmul.f32 %v1323, %v1184
    %1327 = vrot.lane.b32.xlu0 %v1324, 64
    %v1328 = vpop.permute.xlu0 %1327
    %v1330 = vmul.f32 %v1323, %v1328
    %1332 = vrot.lane.b32.xlu0 %v1330, 32
    %v1333 = vpop.permute.xlu0 %1332
    %v1335 = vadd.f32 %v1325, %v1333
    %v1336 = vtanh.pop %v1335
    %1338 = vrot.lane.b32.xlu0 %v1336, 64
    %v1339 = vpop.permute.xlu0 %1338
    %v1341 = vmul.f32 %v1323, %v1339
    %vm1342 = vcmask 254976
    %1343 = vst.msk [vmem:[#allocation2] sm:$0x3] %vm1342, %v1267
    %1345 = vrot.lane.b32.xlu0 %v1258, 96
    %v1346 = vpop.permute.xlu0 %1345
    %1348 = vst.msk [vmem:[#allocation3] sm:$0x3] %vm1342, %v1346
    %1350 = vrot.lane.b32.xlu0 %v1341, 32
    %v1351 = vpop.permute.xlu0 %1350
    %1353 = vst.msk [vmem:[#allocation4] sm:$0x3] %vm1342, %v1351
    %1355 = vrot.lane.b32.xlu0 %v1335, 96
    %v1356 = vpop.permute.xlu0 %1355
    %1358 = vst.msk [vmem:[#allocation5] sm:$0x3] %vm1342, %v1356
    // Predicated region
    $region34: #{tpu_custom_call.1} parent=1 // pred_check
      %p1359 = pneg %p60
    $region35: #{tpu_custom_call.1} parent=1 // pred_check_branch
      %1361 = sbr.rel (%p1359) target = $region37
    $region36: #{tpu_custom_call.1} parent=1 // pred_region
      %1362 = vst.msk [vmem:[#allocation12] sm:$0x3] %vm1342, %v1351
    $region37: #{tpu_custom_call.1} parent=1 // pred_fallthru
      _
    // Predicated region
    $region38: #{tpu_custom_call.1} parent=1 // pred_check
      _
    $region39: #{tpu_custom_call.1} parent=1 // pred_check_branch
      %1364 = sbr.rel (0) target = $region41
    $region40: #{tpu_custom_call.1} parent=1 // pred_region
      %s1366 = ssub.s32 32, 32
      %1367 = vsyncadd [#allocation8], %s1366
      %s1369 = sshll.u32 [#allocation12], 4
      %s1370 = int_to_ptr.vmem [resolvable:$true] %s1369
      %1372 = dma.vmem_to_hbm [thread:$0]  %s1370, 32, %s4, [#allocation8]
    $region41: #{tpu_custom_call.1} parent=1 // pred_fallthru
      _
    // Predicated region
    $region42: #{tpu_custom_call.1} parent=1 // pred_check
      _
    $region43: #{tpu_custom_call.1} parent=1 // pred_check_branch
      %1374 = sbr.rel (0) target = $region45
    $region44: #{tpu_custom_call.1} parent=1 // pred_region
      %1375 = dma.done [#allocation8], 32
    $region45: #{tpu_custom_call.1} parent=1 // pred_fallthru
      _
    %1376 = vsyncpa [#allocation7], 1
    %1377 = vsyncpa [#allocation10], 1
    %1378 = vsyncpa [#allocation8], 1

</llo_original>
